<compile_context>
chip_gen: v7x
topology: tpu7x:2x2x1
jax: 0.10.0
libtpu: 0.0.40
codegen_flags: <defaults>
</compile_context>

<pallas_src>
import jax
import jax.numpy as jnp
from jax.experimental import pallas as pl
from jax.experimental.pallas import tpu as pltpu

INPUT_SIZE = 16
HIDDEN_SIZE = 32
NUM_LAYERS = 2
OUTPUT_SIZE = 4
BATCH_SIZE = 2
SEQ_LEN = 8


# ------------------------- fused Pallas kernel -------------------------

def _bilstm_kernel(x_ref, h0_ref, c0_ref,
                   wih0_ref, whh0_ref, b0_ref,
                   wih1_ref, whh1_ref, b1_ref,
                   wlin_ref, blin_ref,
                   out_ref,
                   x1_scr):
    """Whole-model forward in one grid-less kernel invocation.

    x_ref   : (T*B, 2F)   pre-scheduled time-major input, row block t = [x(t) | x(T-1-t)]
    h0_ref  : (L, B, 2H)  per-layer initial hidden, combined [h_f | h_b]
    c0_ref  : (L, B, 2H)  per-layer initial cell,   combined [c_f | c_b]
    wih*    : (2*F_in, 8H) block-diagonal augmented input weights, gate-interleaved
    whh*    : (2H, 8H)     block-diagonal recurrent weights, gate-interleaved
    b*      : (1, 8H)      gate-interleaved (b_ih + b_hh)
    wlin    : (H, O), blin : (1, O)
    out_ref : (B, O)
    x1_scr  : VMEM (T*B, 4H) pre-scheduled layer-1 input (assembled off the serial chain)

    Gate column layout: [i_f i_b | f_f f_b | g_f g_b | o_f o_b], each H wide.
    """
    _, B, H2 = h0_ref.shape
    H = H2 // 2
    TB = x_ref.shape[0]
    T = TB // B
    G2 = 2 * H                      # combined (fwd|bwd) width of one gate type

    def run_layer(gx, whh, layer):
        """gx: (T*B, 8H) pre-scheduled gate pre-activations (input part + bias).

        Returns the list of per-step combined states hs[s] = [h_f(time s) | h_b(time T-1-s)].
        The recurrence carries h/c as plain values (vregs): no VMEM round-trip.
        """
        h = h0_ref[layer]                                   # (B, 2H) = [h_f | h_b]
        c = c0_ref[layer]
        hs = []
        for t in range(T):                                  # statically unrolled
            hw = jnp.dot(h, whh, preferred_element_type=jnp.float32)   # (B, 8H) MXU
            gates = gx[t * B:(t + 1) * B, :] + hw           # one contiguous slice + add
            sif = jax.nn.sigmoid(gates[:, 0:2 * G2])        # [i | f], 128 lanes (EUP)
            g_g = jnp.tanh(gates[:, 2 * G2:3 * G2])         # g, 64 lanes
            o_g = jax.nn.sigmoid(gates[:, 3 * G2:4 * G2])   # o, 64 lanes
            c = sif[:, G2:2 * G2] * c + sif[:, 0:G2] * g_g  # 64-lane VPU, both dirs at once
            h = o_g * jnp.tanh(c)                           # -> [h_f | h_b] (next MXU LHS)
            hs.append(h)
        return hs

    # ---------------- layer 0 (input projection hoisted out of the loop) ----------------
    gx0 = jnp.dot(x_ref[...], wih0_ref[...],
                  preferred_element_type=jnp.float32) + b0_ref[...]
    hs0 = run_layer(gx0, whh0_ref[...], layer=0)

    # ------ assemble layer-1's pre-scheduled input (off the serial recurrence) ------
    # x1_scr row block t holds [state(t) | state(T-1-t)] where
    # state(s) = hs0[s] = [h_f(time s) | h_b(time T-1-s)]; wih1 is packed to match.
    for t in range(T):
        x1_scr[t * B:(t + 1) * B, 0:2 * H] = hs0[t]
        x1_scr[(T - 1 - t) * B:(T - t) * B, 2 * H:4 * H] = hs0[t]

    # ---------------- layer 1 (input stays VMEM-resident) ----------------
    gx1 = jnp.dot(x1_scr[...], wih1_ref[...],
                  preferred_element_type=jnp.float32) + b1_ref[...]
    hs1 = run_layer(gx1, whh1_ref[...], layer=1)

    # ------ mean over the 2 directions at the last timestep + fused Linear ------
    hf_last = hs1[T - 1][:, 0:H]        # forward output at time T-1
    hb_last = hs1[0][:, H:2 * H]        # backward output at time T-1
    last = 0.5 * (hf_last + hb_last)
    out_ref[...] = (jnp.dot(last, wlin_ref[...],
                            preferred_element_type=jnp.float32) + blin_ref[...])


# ------------------------- one-time weight packing -------------------------

def _interleave_gates(v_f, v_b, H):
    """[..., 4H] fwd & bwd gate blocks (i,f,g,o) -> [..., 8H] interleaved
    columns [i_f i_b | f_f f_b | g_f g_b | o_f o_b]."""
    parts = []
    for k in range(4):
        parts.append(v_f[..., k * H:(k + 1) * H])
        parts.append(v_b[..., k * H:(k + 1) * H])
    return jnp.concatenate(parts, axis=-1)


def prepare_params(params):
    """One-time packing into the kernel's augmented, gate-interleaved layout.

    Hoisted out of the per-call path per the performance review: call once and
    pass the result to bilstm_forward.
    """
    H = HIDDEN_SIZE
    l0, l1 = params["layers"]

    def z(x):
        return jnp.zeros_like(x)

    # layer 0: augmented input row block t = [x(t) | x(T-1-t)]
    wih0 = jnp.concatenate(
        [_interleave_gates(l0["wih_f"], z(l0["wih_f"]), H),        # rows <- x(t)      (fwd dir)
         _interleave_gates(z(l0["wih_b"]), l0["wih_b"], H)],       # rows <- x(T-1-t)  (bwd dir)
        axis=0)                                                    # (2F, 8H)

    # layer 1: augmented input row block t = [state(t) | state(T-1-t)],
    # state(s) = [h_f(s) | h_b(T-1-s)] (raw per-step combined state of layer 0).
    wf, wb = l1["wih_f"], l1["wih_b"]      # (2H, 4H): rows 0:H fwd-feature, H:2H bwd-feature
    wih1 = jnp.concatenate(
        [_interleave_gates(wf[0:H], z(wf[0:H]), H),                # rows <- h_f(t)      (fwd dir)
         _interleave_gates(z(wb[H:2 * H]), wb[H:2 * H], H),        # rows <- h_b(T-1-t)  (bwd dir)
         _interleave_gates(z(wb[0:H]), wb[0:H], H),                # rows <- h_f(T-1-t)  (bwd dir)
         _interleave_gates(wf[H:2 * H], z(wf[H:2 * H]), H)],       # rows <- h_b(t)      (fwd dir)
        axis=0)                                                    # (4H, 8H)

    def whh_blk(layer):
        return jnp.concatenate(
            [_interleave_gates(layer["whh_f"], z(layer["whh_f"]), H),
             _interleave_gates(z(layer["whh_b"]), layer["whh_b"], H)], axis=0)   # (2H, 8H)

    def bias(layer):
        return _interleave_gates(layer["b_f"], layer["b_b"], H)                  # (1, 8H)

    return {
        "wih0": wih0, "whh0": whh_blk(l0), "b0": bias(l0),
        "wih1": wih1, "whh1": whh_blk(l1), "b1": bias(l1),
        "w_lin": params["w_lin"], "b_lin": params["b_lin"],
    }


# ------------------------- wrapper -------------------------

def bilstm_forward(packed, input_seq, h0, c0):
    """packed: prepare_params(...) output.  input_seq: (B, T, input_size).
    h0, c0: (2*num_layers, B, H) in PyTorch order [l0_f, l0_b, l1_f, l1_b]."""
    B, T, F = input_seq.shape
    # pre-scheduled, time-major augmented input: row block t = [x(t) | x(T-1-t)]
    x_tm = jnp.transpose(input_seq, (1, 0, 2)).reshape(T * B, F)
    x_rv = jnp.transpose(input_seq[:, ::-1, :], (1, 0, 2)).reshape(T * B, F)
    x_aug = jnp.concatenate([x_tm, x_rv], axis=1)                  # (T*B, 2F)
    # combined per-layer initial state [h_f | h_b]
    h0c = jnp.concatenate([h0[0::2], h0[1::2]], axis=-1)           # (L, B, 2H)
    c0c = jnp.concatenate([c0[0::2], c0[1::2]], axis=-1)
    return pl.pallas_call(
        _bilstm_kernel,
        out_shape=jax.ShapeDtypeStruct((B, OUTPUT_SIZE), jnp.float32),
        scratch_shapes=[
            pltpu.VMEM((T * B, 4 * HIDDEN_SIZE), jnp.float32),     # layer-1 pre-scheduled input
        ],
    )(x_aug, h0c, c0c,
      packed["wih0"], packed["whh0"], packed["b0"],
      packed["wih1"], packed["whh1"], packed["b1"],
      packed["w_lin"], packed["b_lin"])


# ------------------------- parameters -------------------------

def init_params(key):
    params = {"layers": []}
    bound = 1.0 / float(jnp.sqrt(HIDDEN_SIZE))
    for l in range(NUM_LAYERS):
        in_size = INPUT_SIZE if l == 0 else 2 * HIDDEN_SIZE
        layer = {}
        for d in ("f", "b"):   # forward / backward direction
            key, k1, k2, k3, k4 = jax.random.split(key, 5)
            layer[f"wih_{d}"] = jax.random.uniform(
                k1, (in_size, 4 * HIDDEN_SIZE), jnp.float32, -bound, bound)
            layer[f"whh_{d}"] = jax.random.uniform(
                k2, (HIDDEN_SIZE, 4 * HIDDEN_SIZE), jnp.float32, -bound, bound)
            b_ih = jax.random.uniform(k3, (4 * HIDDEN_SIZE,), jnp.float32, -bound, bound)
            b_hh = jax.random.uniform(k4, (4 * HIDDEN_SIZE,), jnp.float32, -bound, bound)
            layer[f"b_{d}"] = (b_ih + b_hh)[None, :]
        params["layers"].append(layer)
    key, k1, k2 = jax.random.split(key, 3)
    params["w_lin"] = jax.random.uniform(
        k1, (HIDDEN_SIZE, OUTPUT_SIZE), jnp.float32, -bound, bound)
    params["b_lin"] = jax.random.uniform(
        k2, (1, OUTPUT_SIZE), jnp.float32, -bound, bound)
    return params


# ------------------------- pure-JAX reference -------------------------

def _ref_cell(x, h, c, wih, whh, b):
    gates = x @ wih + h @ whh + b
    i, f, g, o = jnp.split(gates, 4, axis=-1)
    c = jax.nn.sigmoid(f) * c + jax.nn.sigmoid(i) * jnp.tanh(g)
    h = jax.nn.sigmoid(o) * jnp.tanh(c)
    return h, c


def bilstm_ref(params, input_seq, h0, c0):
    inp = jnp.transpose(input_seq, (1, 0, 2))
    out_f = out_b = None
    for l, layer in enumerate(params["layers"]):
        def scan_dir(x_seq, h, c, wih, whh, b):
            def step(carry, xt):
                h, c = _ref_cell(xt, carry[0], carry[1], wih, whh, b)
                return (h, c), h
            _, hs = jax.lax.scan(step, (h, c), x_seq)
            return hs
        out_f = scan_dir(inp, h0[2 * l], c0[2 * l],
                         layer["wih_f"], layer["whh_f"], layer["b_f"])
        out_b = scan_dir(inp[::-1], h0[2 * l + 1], c0[2 * l + 1],
                         layer["wih_b"], layer["whh_b"], layer["b_b"])[::-1]
        inp = jnp.concatenate([out_f, out_b], axis=-1)
    mean_out = 0.5 * (out_f + out_b)
    return mean_out[-1] @ params["w_lin"] + params["b_lin"]


if __name__ == "__main__":
    key = jax.random.PRNGKey(0)
    kp, kx, kh, kc = jax.random.split(key, 4)
    params = init_params(kp)
    packed = prepare_params(params)          # one-time weight repacking (outside jit)
    x = jax.random.normal(kx, (BATCH_SIZE, SEQ_LEN, INPUT_SIZE), jnp.float32)
    # the PyTorch forward draws h_0/c_0 with torch.randn; we use deterministic normals
    h0 = jax.random.normal(kh, (2 * NUM_LAYERS, BATCH_SIZE, HIDDEN_SIZE), jnp.float32)
    c0 = jax.random.normal(kc, (2 * NUM_LAYERS, BATCH_SIZE, HIDDEN_SIZE), jnp.float32)

    fwd = jax.jit(bilstm_forward)
    pred = jax.block_until_ready(fwd(packed, x, h0, c0))
    assert pred.shape == (BATCH_SIZE, OUTPUT_SIZE)

    ref = bilstm_ref(params, x, h0, c0)
    assert jnp.allclose(pred, ref, atol=1e-2, rtol=1e-2), (pred, ref)

    print("KERNEL_OK")
</pallas_src>

<mosaic_0001>
module attributes {stable_mosaic.version = 11 : i64} {
  func.func @_bilstm_kernel(%arg0: memref<16x32xf32, #tpu.memory_space<vmem>>, %arg1: memref<2x2x64xf32, #tpu.memory_space<vmem>>, %arg2: memref<2x2x64xf32, #tpu.memory_space<vmem>>, %arg3: memref<32x256xf32, #tpu.memory_space<vmem>>, %arg4: memref<64x256xf32, #tpu.memory_space<vmem>>, %arg5: memref<1x256xf32, #tpu.memory_space<vmem>>, %arg6: memref<128x256xf32, #tpu.memory_space<vmem>>, %arg7: memref<64x256xf32, #tpu.memory_space<vmem>>, %arg8: memref<1x256xf32, #tpu.memory_space<vmem>>, %arg9: memref<32x4xf32, #tpu.memory_space<vmem>>, %arg10: memref<1x4xf32, #tpu.memory_space<vmem>>, %arg11: memref<2x4xf32, #tpu.memory_space<vmem>>, %arg12: memref<16x128xf32, #tpu.memory_space<vmem>>) attributes {dimension_semantics = [], scalar_prefetch = 0 : i64, scratch_operands = 1 : i64, tpu.core_type = #tpu.core_type<tc>} {
    %c0 = arith.constant 0 : index
    %c0_0 = arith.constant 0 : index
    %0 = vector.load %arg0[%c0, %c0_0] : memref<16x32xf32, #tpu.memory_space<vmem>>, vector<16x32xf32>
    %c0_1 = arith.constant 0 : index
    %c0_2 = arith.constant 0 : index
    %1 = vector.load %arg3[%c0_1, %c0_2] : memref<32x256xf32, #tpu.memory_space<vmem>>, vector<32x256xf32>
    %cst = arith.constant dense<0.000000e+00> : vector<16x256xf32>
    %2 = tpu.matmul %0, %1, %cst {dimension_numbers = #tpu.dot_dimension_numbers<[1], [0], [0], [1], [0, 0, 1, 1], [], []>} : vector<16x32xf32>, vector<32x256xf32>, vector<16x256xf32> -> vector<16x256xf32>
    %c0_3 = arith.constant 0 : index
    %c0_4 = arith.constant 0 : index
    %3 = vector.load %arg5[%c0_3, %c0_4] : memref<1x256xf32, #tpu.memory_space<vmem>>, vector<1x256xf32>
    %4 = vector.broadcast %3 : vector<1x256xf32> to vector<16x256xf32>
    %5 = arith.addf %2, %4 : vector<16x256xf32>
    %c0_5 = arith.constant 0 : index
    %c0_6 = arith.constant 0 : index
    %6 = vector.load %arg4[%c0_5, %c0_6] : memref<64x256xf32, #tpu.memory_space<vmem>>, vector<64x256xf32>
    %c0_7 = arith.constant 0 : index
    %c0_8 = arith.constant 0 : index
    %c0_9 = arith.constant 0 : index
    %7 = vector.load %arg1[%c0_7, %c0_8, %c0_9] : memref<2x2x64xf32, #tpu.memory_space<vmem>>, vector<1x2x64xf32>
    %8 = vector.shape_cast %7 : vector<1x2x64xf32> to vector<2x64xf32>
    %c0_10 = arith.constant 0 : index
    %c0_11 = arith.constant 0 : index
    %c0_12 = arith.constant 0 : index
    %9 = vector.load %arg2[%c0_10, %c0_11, %c0_12] : memref<2x2x64xf32, #tpu.memory_space<vmem>>, vector<1x2x64xf32>
    %10 = vector.shape_cast %9 : vector<1x2x64xf32> to vector<2x64xf32>
    %cst_13 = arith.constant dense<0.000000e+00> : vector<2x256xf32>
    %11 = tpu.matmul %8, %6, %cst_13 {dimension_numbers = #tpu.dot_dimension_numbers<[1], [0], [0], [1], [0, 0, 1, 1], [], []>} : vector<2x64xf32>, vector<64x256xf32>, vector<2x256xf32> -> vector<2x256xf32>
    %12 = vector.extract_strided_slice %5 {offsets = [0, 0], sizes = [2, 256], strides = [1, 1]} : vector<16x256xf32> to vector<2x256xf32>
    %13 = arith.addf %12, %11 : vector<2x256xf32>
    %14 = vector.extract_strided_slice %13 {offsets = [0, 0], sizes = [2, 128], strides = [1, 1]} : vector<2x256xf32> to vector<2x128xf32>
    %15 = arith.negf %14 : vector<2x128xf32>
    %16 = math.exp %15 : vector<2x128xf32>
    %cst_14 = arith.constant 1.000000e+00 : f32
    %17 = vector.broadcast %cst_14 : f32 to vector<2x128xf32>
    %18 = arith.addf %17, %16 : vector<2x128xf32>
    %19 = arith.divf %17, %18 : vector<2x128xf32>
    %20 = vector.extract_strided_slice %13 {offsets = [0, 128], sizes = [2, 64], strides = [1, 1]} : vector<2x256xf32> to vector<2x64xf32>
    %21 = math.tanh %20 : vector<2x64xf32>
    %22 = vector.extract_strided_slice %13 {offsets = [0, 192], sizes = [2, 64], strides = [1, 1]} : vector<2x256xf32> to vector<2x64xf32>
    %23 = arith.negf %22 : vector<2x64xf32>
    %24 = math.exp %23 : vector<2x64xf32>
    %cst_15 = arith.constant 1.000000e+00 : f32
    %25 = vector.broadcast %cst_15 : f32 to vector<2x64xf32>
    %26 = arith.addf %25, %24 : vector<2x64xf32>
    %27 = arith.divf %25, %26 : vector<2x64xf32>
    %28 = vector.extract_strided_slice %19 {offsets = [0, 64], sizes = [2, 64], strides = [1, 1]} : vector<2x128xf32> to vector<2x64xf32>
    %29 = arith.mulf %28, %10 : vector<2x64xf32>
    %30 = vector.extract_strided_slice %19 {offsets = [0, 0], sizes = [2, 64], strides = [1, 1]} : vector<2x128xf32> to vector<2x64xf32>
    %31 = arith.mulf %30, %21 : vector<2x64xf32>
    %32 = arith.addf %29, %31 : vector<2x64xf32>
    %33 = math.tanh %32 : vector<2x64xf32>
    %34 = arith.mulf %27, %33 : vector<2x64xf32>
    %cst_16 = arith.constant dense<0.000000e+00> : vector<2x256xf32>
    %35 = tpu.matmul %34, %6, %cst_16 {dimension_numbers = #tpu.dot_dimension_numbers<[1], [0], [0], [1], [0, 0, 1, 1], [], []>} : vector<2x64xf32>, vector<64x256xf32>, vector<2x256xf32> -> vector<2x256xf32>
    %36 = vector.extract_strided_slice %5 {offsets = [2, 0], sizes = [2, 256], strides = [1, 1]} : vector<16x256xf32> to vector<2x256xf32>
    %37 = arith.addf %36, %35 : vector<2x256xf32>
    %38 = vector.extract_strided_slice %37 {offsets = [0, 0], sizes = [2, 128], strides = [1, 1]} : vector<2x256xf32> to vector<2x128xf32>
    %39 = arith.negf %38 : vector<2x128xf32>
    %40 = math.exp %39 : vector<2x128xf32>
    %cst_17 = arith.constant 1.000000e+00 : f32
    %41 = vector.broadcast %cst_17 : f32 to vector<2x128xf32>
    %42 = arith.addf %41, %40 : vector<2x128xf32>
    %43 = arith.divf %41, %42 : vector<2x128xf32>
    %44 = vector.extract_strided_slice %37 {offsets = [0, 128], sizes = [2, 64], strides = [1, 1]} : vector<2x256xf32> to vector<2x64xf32>
    %45 = math.tanh %44 : vector<2x64xf32>
    %46 = vector.extract_strided_slice %37 {offsets = [0, 192], sizes = [2, 64], strides = [1, 1]} : vector<2x256xf32> to vector<2x64xf32>
    %47 = arith.negf %46 : vector<2x64xf32>
    %48 = math.exp %47 : vector<2x64xf32>
    %cst_18 = arith.constant 1.000000e+00 : f32
    %49 = vector.broadcast %cst_18 : f32 to vector<2x64xf32>
    %50 = arith.addf %49, %48 : vector<2x64xf32>
    %51 = arith.divf %49, %50 : vector<2x64xf32>
    %52 = vector.extract_strided_slice %43 {offsets = [0, 64], sizes = [2, 64], strides = [1, 1]} : vector<2x128xf32> to vector<2x64xf32>
    %53 = arith.mulf %52, %32 : vector<2x64xf32>
    %54 = vector.extract_strided_slice %43 {offsets = [0, 0], sizes = [2, 64], strides = [1, 1]} : vector<2x128xf32> to vector<2x64xf32>
    %55 = arith.mulf %54, %45 : vector<2x64xf32>
    %56 = arith.addf %53, %55 : vector<2x64xf32>
    %57 = math.tanh %56 : vector<2x64xf32>
    %58 = arith.mulf %51, %57 : vector<2x64xf32>
    %cst_19 = arith.constant dense<0.000000e+00> : vector<2x256xf32>
    %59 = tpu.matmul %58, %6, %cst_19 {dimension_numbers = #tpu.dot_dimension_numbers<[1], [0], [0], [1], [0, 0, 1, 1], [], []>} : vector<2x64xf32>, vector<64x256xf32>, vector<2x256xf32> -> vector<2x256xf32>
    %60 = vector.extract_strided_slice %5 {offsets = [4, 0], sizes = [2, 256], strides = [1, 1]} : vector<16x256xf32> to vector<2x256xf32>
    %61 = arith.addf %60, %59 : vector<2x256xf32>
    %62 = vector.extract_strided_slice %61 {offsets = [0, 0], sizes = [2, 128], strides = [1, 1]} : vector<2x256xf32> to vector<2x128xf32>
    %63 = arith.negf %62 : vector<2x128xf32>
    %64 = math.exp %63 : vector<2x128xf32>
    %cst_20 = arith.constant 1.000000e+00 : f32
    %65 = vector.broadcast %cst_20 : f32 to vector<2x128xf32>
    %66 = arith.addf %65, %64 : vector<2x128xf32>
    %67 = arith.divf %65, %66 : vector<2x128xf32>
    %68 = vector.extract_strided_slice %61 {offsets = [0, 128], sizes = [2, 64], strides = [1, 1]} : vector<2x256xf32> to vector<2x64xf32>
    %69 = math.tanh %68 : vector<2x64xf32>
    %70 = vector.extract_strided_slice %61 {offsets = [0, 192], sizes = [2, 64], strides = [1, 1]} : vector<2x256xf32> to vector<2x64xf32>
    %71 = arith.negf %70 : vector<2x64xf32>
    %72 = math.exp %71 : vector<2x64xf32>
    %cst_21 = arith.constant 1.000000e+00 : f32
    %73 = vector.broadcast %cst_21 : f32 to vector<2x64xf32>
    %74 = arith.addf %73, %72 : vector<2x64xf32>
    %75 = arith.divf %73, %74 : vector<2x64xf32>
    %76 = vector.extract_strided_slice %67 {offsets = [0, 64], sizes = [2, 64], strides = [1, 1]} : vector<2x128xf32> to vector<2x64xf32>
    %77 = arith.mulf %76, %56 : vector<2x64xf32>
    %78 = vector.extract_strided_slice %67 {offsets = [0, 0], sizes = [2, 64], strides = [1, 1]} : vector<2x128xf32> to vector<2x64xf32>
    %79 = arith.mulf %78, %69 : vector<2x64xf32>
    %80 = arith.addf %77, %79 : vector<2x64xf32>
    %81 = math.tanh %80 : vector<2x64xf32>
    %82 = arith.mulf %75, %81 : vector<2x64xf32>
    %cst_22 = arith.constant dense<0.000000e+00> : vector<2x256xf32>
    %83 = tpu.matmul %82, %6, %cst_22 {dimension_numbers = #tpu.dot_dimension_numbers<[1], [0], [0], [1], [0, 0, 1, 1], [], []>} : vector<2x64xf32>, vector<64x256xf32>, vector<2x256xf32> -> vector<2x256xf32>
    %84 = vector.extract_strided_slice %5 {offsets = [6, 0], sizes = [2, 256], strides = [1, 1]} : vector<16x256xf32> to vector<2x256xf32>
    %85 = arith.addf %84, %83 : vector<2x256xf32>
    %86 = vector.extract_strided_slice %85 {offsets = [0, 0], sizes = [2, 128], strides = [1, 1]} : vector<2x256xf32> to vector<2x128xf32>
    %87 = arith.negf %86 : vector<2x128xf32>
    %88 = math.exp %87 : vector<2x128xf32>
    %cst_23 = arith.constant 1.000000e+00 : f32
    %89 = vector.broadcast %cst_23 : f32 to vector<2x128xf32>
    %90 = arith.addf %89, %88 : vector<2x128xf32>
    %91 = arith.divf %89, %90 : vector<2x128xf32>
    %92 = vector.extract_strided_slice %85 {offsets = [0, 128], sizes = [2, 64], strides = [1, 1]} : vector<2x256xf32> to vector<2x64xf32>
    %93 = math.tanh %92 : vector<2x64xf32>
    %94 = vector.extract_strided_slice %85 {offsets = [0, 192], sizes = [2, 64], strides = [1, 1]} : vector<2x256xf32> to vector<2x64xf32>
    %95 = arith.negf %94 : vector<2x64xf32>
    %96 = math.exp %95 : vector<2x64xf32>
    %cst_24 = arith.constant 1.000000e+00 : f32
    %97 = vector.broadcast %cst_24 : f32 to vector<2x64xf32>
    %98 = arith.addf %97, %96 : vector<2x64xf32>
    %99 = arith.divf %97, %98 : vector<2x64xf32>
    %100 = vector.extract_strided_slice %91 {offsets = [0, 64], sizes = [2, 64], strides = [1, 1]} : vector<2x128xf32> to vector<2x64xf32>
    %101 = arith.mulf %100, %80 : vector<2x64xf32>
    %102 = vector.extract_strided_slice %91 {offsets = [0, 0], sizes = [2, 64], strides = [1, 1]} : vector<2x128xf32> to vector<2x64xf32>
    %103 = arith.mulf %102, %93 : vector<2x64xf32>
    %104 = arith.addf %101, %103 : vector<2x64xf32>
    %105 = math.tanh %104 : vector<2x64xf32>
    %106 = arith.mulf %99, %105 : vector<2x64xf32>
    %cst_25 = arith.constant dense<0.000000e+00> : vector<2x256xf32>
    %107 = tpu.matmul %106, %6, %cst_25 {dimension_numbers = #tpu.dot_dimension_numbers<[1], [0], [0], [1], [0, 0, 1, 1], [], []>} : vector<2x64xf32>, vector<64x256xf32>, vector<2x256xf32> -> vector<2x256xf32>
    %108 = vector.extract_strided_slice %5 {offsets = [8, 0], sizes = [2, 256], strides = [1, 1]} : vector<16x256xf32> to vector<2x256xf32>
    %109 = arith.addf %108, %107 : vector<2x256xf32>
    %110 = vector.extract_strided_slice %109 {offsets = [0, 0], sizes = [2, 128], strides = [1, 1]} : vector<2x256xf32> to vector<2x128xf32>
    %111 = arith.negf %110 : vector<2x128xf32>
    %112 = math.exp %111 : vector<2x128xf32>
    %cst_26 = arith.constant 1.000000e+00 : f32
    %113 = vector.broadcast %cst_26 : f32 to vector<2x128xf32>
    %114 = arith.addf %113, %112 : vector<2x128xf32>
    %115 = arith.divf %113, %114 : vector<2x128xf32>
    %116 = vector.extract_strided_slice %109 {offsets = [0, 128], sizes = [2, 64], strides = [1, 1]} : vector<2x256xf32> to vector<2x64xf32>
    %117 = math.tanh %116 : vector<2x64xf32>
    %118 = vector.extract_strided_slice %109 {offsets = [0, 192], sizes = [2, 64], strides = [1, 1]} : vector<2x256xf32> to vector<2x64xf32>
    %119 = arith.negf %118 : vector<2x64xf32>
    %120 = math.exp %119 : vector<2x64xf32>
    %cst_27 = arith.constant 1.000000e+00 : f32
    %121 = vector.broadcast %cst_27 : f32 to vector<2x64xf32>
    %122 = arith.addf %121, %120 : vector<2x64xf32>
    %123 = arith.divf %121, %122 : vector<2x64xf32>
    %124 = vector.extract_strided_slice %115 {offsets = [0, 64], sizes = [2, 64], strides = [1, 1]} : vector<2x128xf32> to vector<2x64xf32>
    %125 = arith.mulf %124, %104 : vector<2x64xf32>
    %126 = vector.extract_strided_slice %115 {offsets = [0, 0], sizes = [2, 64], strides = [1, 1]} : vector<2x128xf32> to vector<2x64xf32>
    %127 = arith.mulf %126, %117 : vector<2x64xf32>
    %128 = arith.addf %125, %127 : vector<2x64xf32>
    %129 = math.tanh %128 : vector<2x64xf32>
    %130 = arith.mulf %123, %129 : vector<2x64xf32>
    %cst_28 = arith.constant dense<0.000000e+00> : vector<2x256xf32>
    %131 = tpu.matmul %130, %6, %cst_28 {dimension_numbers = #tpu.dot_dimension_numbers<[1], [0], [0], [1], [0, 0, 1, 1], [], []>} : vector<2x64xf32>, vector<64x256xf32>, vector<2x256xf32> -> vector<2x256xf32>
    %132 = vector.extract_strided_slice %5 {offsets = [10, 0], sizes = [2, 256], strides = [1, 1]} : vector<16x256xf32> to vector<2x256xf32>
    %133 = arith.addf %132, %131 : vector<2x256xf32>
    %134 = vector.extract_strided_slice %133 {offsets = [0, 0], sizes = [2, 128], strides = [1, 1]} : vector<2x256xf32> to vector<2x128xf32>
    %135 = arith.negf %134 : vector<2x128xf32>
    %136 = math.exp %135 : vector<2x128xf32>
    %cst_29 = arith.constant 1.000000e+00 : f32
    %137 = vector.broadcast %cst_29 : f32 to vector<2x128xf32>
    %138 = arith.addf %137, %136 : vector<2x128xf32>
    %139 = arith.divf %137, %138 : vector<2x128xf32>
    %140 = vector.extract_strided_slice %133 {offsets = [0, 128], sizes = [2, 64], strides = [1, 1]} : vector<2x256xf32> to vector<2x64xf32>
    %141 = math.tanh %140 : vector<2x64xf32>
    %142 = vector.extract_strided_slice %133 {offsets = [0, 192], sizes = [2, 64], strides = [1, 1]} : vector<2x256xf32> to vector<2x64xf32>
    %143 = arith.negf %142 : vector<2x64xf32>
    %144 = math.exp %143 : vector<2x64xf32>
    %cst_30 = arith.constant 1.000000e+00 : f32
    %145 = vector.broadcast %cst_30 : f32 to vector<2x64xf32>
    %146 = arith.addf %145, %144 : vector<2x64xf32>
    %147 = arith.divf %145, %146 : vector<2x64xf32>
    %148 = vector.extract_strided_slice %139 {offsets = [0, 64], sizes = [2, 64], strides = [1, 1]} : vector<2x128xf32> to vector<2x64xf32>
    %149 = arith.mulf %148, %128 : vector<2x64xf32>
    %150 = vector.extract_strided_slice %139 {offsets = [0, 0], sizes = [2, 64], strides = [1, 1]} : vector<2x128xf32> to vector<2x64xf32>
    %151 = arith.mulf %150, %141 : vector<2x64xf32>
    %152 = arith.addf %149, %151 : vector<2x64xf32>
    %153 = math.tanh %152 : vector<2x64xf32>
    %154 = arith.mulf %147, %153 : vector<2x64xf32>
    %cst_31 = arith.constant dense<0.000000e+00> : vector<2x256xf32>
    %155 = tpu.matmul %154, %6, %cst_31 {dimension_numbers = #tpu.dot_dimension_numbers<[1], [0], [0], [1], [0, 0, 1, 1], [], []>} : vector<2x64xf32>, vector<64x256xf32>, vector<2x256xf32> -> vector<2x256xf32>
    %156 = vector.extract_strided_slice %5 {offsets = [12, 0], sizes = [2, 256], strides = [1, 1]} : vector<16x256xf32> to vector<2x256xf32>
    %157 = arith.addf %156, %155 : vector<2x256xf32>
    %158 = vector.extract_strided_slice %157 {offsets = [0, 0], sizes = [2, 128], strides = [1, 1]} : vector<2x256xf32> to vector<2x128xf32>
    %159 = arith.negf %158 : vector<2x128xf32>
    %160 = math.exp %159 : vector<2x128xf32>
    %cst_32 = arith.constant 1.000000e+00 : f32
    %161 = vector.broadcast %cst_32 : f32 to vector<2x128xf32>
    %162 = arith.addf %161, %160 : vector<2x128xf32>
    %163 = arith.divf %161, %162 : vector<2x128xf32>
    %164 = vector.extract_strided_slice %157 {offsets = [0, 128], sizes = [2, 64], strides = [1, 1]} : vector<2x256xf32> to vector<2x64xf32>
    %165 = math.tanh %164 : vector<2x64xf32>
    %166 = vector.extract_strided_slice %157 {offsets = [0, 192], sizes = [2, 64], strides = [1, 1]} : vector<2x256xf32> to vector<2x64xf32>
    %167 = arith.negf %166 : vector<2x64xf32>
    %168 = math.exp %167 : vector<2x64xf32>
    %cst_33 = arith.constant 1.000000e+00 : f32
    %169 = vector.broadcast %cst_33 : f32 to vector<2x64xf32>
    %170 = arith.addf %169, %168 : vector<2x64xf32>
    %171 = arith.divf %169, %170 : vector<2x64xf32>
    %172 = vector.extract_strided_slice %163 {offsets = [0, 64], sizes = [2, 64], strides = [1, 1]} : vector<2x128xf32> to vector<2x64xf32>
    %173 = arith.mulf %172, %152 : vector<2x64xf32>
    %174 = vector.extract_strided_slice %163 {offsets = [0, 0], sizes = [2, 64], strides = [1, 1]} : vector<2x128xf32> to vector<2x64xf32>
    %175 = arith.mulf %174, %165 : vector<2x64xf32>
    %176 = arith.addf %173, %175 : vector<2x64xf32>
    %177 = math.tanh %176 : vector<2x64xf32>
    %178 = arith.mulf %171, %177 : vector<2x64xf32>
    %cst_34 = arith.constant dense<0.000000e+00> : vector<2x256xf32>
    %179 = tpu.matmul %178, %6, %cst_34 {dimension_numbers = #tpu.dot_dimension_numbers<[1], [0], [0], [1], [0, 0, 1, 1], [], []>} : vector<2x64xf32>, vector<64x256xf32>, vector<2x256xf32> -> vector<2x256xf32>
    %180 = vector.extract_strided_slice %5 {offsets = [14, 0], sizes = [2, 256], strides = [1, 1]} : vector<16x256xf32> to vector<2x256xf32>
    %181 = arith.addf %180, %179 : vector<2x256xf32>
    %182 = vector.extract_strided_slice %181 {offsets = [0, 0], sizes = [2, 128], strides = [1, 1]} : vector<2x256xf32> to vector<2x128xf32>
    %183 = arith.negf %182 : vector<2x128xf32>
    %184 = math.exp %183 : vector<2x128xf32>
    %cst_35 = arith.constant 1.000000e+00 : f32
    %185 = vector.broadcast %cst_35 : f32 to vector<2x128xf32>
    %186 = arith.addf %185, %184 : vector<2x128xf32>
    %187 = arith.divf %185, %186 : vector<2x128xf32>
    %188 = vector.extract_strided_slice %181 {offsets = [0, 128], sizes = [2, 64], strides = [1, 1]} : vector<2x256xf32> to vector<2x64xf32>
    %189 = math.tanh %188 : vector<2x64xf32>
    %190 = vector.extract_strided_slice %181 {offsets = [0, 192], sizes = [2, 64], strides = [1, 1]} : vector<2x256xf32> to vector<2x64xf32>
    %191 = arith.negf %190 : vector<2x64xf32>
    %192 = math.exp %191 : vector<2x64xf32>
    %cst_36 = arith.constant 1.000000e+00 : f32
    %193 = vector.broadcast %cst_36 : f32 to vector<2x64xf32>
    %194 = arith.addf %193, %192 : vector<2x64xf32>
    %195 = arith.divf %193, %194 : vector<2x64xf32>
    %196 = vector.extract_strided_slice %187 {offsets = [0, 64], sizes = [2, 64], strides = [1, 1]} : vector<2x128xf32> to vector<2x64xf32>
    %197 = arith.mulf %196, %176 : vector<2x64xf32>
    %198 = vector.extract_strided_slice %187 {offsets = [0, 0], sizes = [2, 64], strides = [1, 1]} : vector<2x128xf32> to vector<2x64xf32>
    %199 = arith.mulf %198, %189 : vector<2x64xf32>
    %200 = arith.addf %197, %199 : vector<2x64xf32>
    %201 = math.tanh %200 : vector<2x64xf32>
    %202 = arith.mulf %195, %201 : vector<2x64xf32>
    %c0_37 = arith.constant 0 : index
    %c0_38 = arith.constant 0 : index
    %203 = vector.load %arg12[%c0_37, %c0_38] : memref<16x128xf32, #tpu.memory_space<vmem>>, vector<2x64xf32>
    tpu.vector_store %arg12[%c0_37, %c0_38], %34 {strides = array<i32>} : memref<16x128xf32, #tpu.memory_space<vmem>>, vector<2x64xf32>,
    %c14 = arith.constant 14 : index
    %c64 = arith.constant 64 : index
    %204 = vector.load %arg12[%c14, %c64] : memref<16x128xf32, #tpu.memory_space<vmem>>, vector<2x64xf32>
    tpu.vector_store %arg12[%c14, %c64], %34 {strides = array<i32>} : memref<16x128xf32, #tpu.memory_space<vmem>>, vector<2x64xf32>,
    %c2 = arith.constant 2 : index
    %c0_39 = arith.constant 0 : index
    %205 = vector.load %arg12[%c2, %c0_39] : memref<16x128xf32, #tpu.memory_space<vmem>>, vector<2x64xf32>
    tpu.vector_store %arg12[%c2, %c0_39], %58 {strides = array<i32>} : memref<16x128xf32, #tpu.memory_space<vmem>>, vector<2x64xf32>,
    %c12 = arith.constant 12 : index
    %c64_40 = arith.constant 64 : index
    %206 = vector.load %arg12[%c12, %c64_40] : memref<16x128xf32, #tpu.memory_space<vmem>>, vector<2x64xf32>
    tpu.vector_store %arg12[%c12, %c64_40], %58 {strides = array<i32>} : memref<16x128xf32, #tpu.memory_space<vmem>>, vector<2x64xf32>,
    %c4 = arith.constant 4 : index
    %c0_41 = arith.constant 0 : index
    %207 = vector.load %arg12[%c4, %c0_41] : memref<16x128xf32, #tpu.memory_space<vmem>>, vector<2x64xf32>
    tpu.vector_store %arg12[%c4, %c0_41], %82 {strides = array<i32>} : memref<16x128xf32, #tpu.memory_space<vmem>>, vector<2x64xf32>,
    %c10 = arith.constant 10 : index
    %c64_42 = arith.constant 64 : index
    %208 = vector.load %arg12[%c10, %c64_42] : memref<16x128xf32, #tpu.memory_space<vmem>>, vector<2x64xf32>
    tpu.vector_store %arg12[%c10, %c64_42], %82 {strides = array<i32>} : memref<16x128xf32, #tpu.memory_space<vmem>>, vector<2x64xf32>,
    %c6 = arith.constant 6 : index
    %c0_43 = arith.constant 0 : index
    %209 = vector.load %arg12[%c6, %c0_43] : memref<16x128xf32, #tpu.memory_space<vmem>>, vector<2x64xf32>
    tpu.vector_store %arg12[%c6, %c0_43], %106 {strides = array<i32>} : memref<16x128xf32, #tpu.memory_space<vmem>>, vector<2x64xf32>,
    %c8 = arith.constant 8 : index
    %c64_44 = arith.constant 64 : index
    %210 = vector.load %arg12[%c8, %c64_44] : memref<16x128xf32, #tpu.memory_space<vmem>>, vector<2x64xf32>
    tpu.vector_store %arg12[%c8, %c64_44], %106 {strides = array<i32>} : memref<16x128xf32, #tpu.memory_space<vmem>>, vector<2x64xf32>,
    %c8_45 = arith.constant 8 : index
    %c0_46 = arith.constant 0 : index
    %211 = vector.load %arg12[%c8_45, %c0_46] : memref<16x128xf32, #tpu.memory_space<vmem>>, vector<2x64xf32>
    tpu.vector_store %arg12[%c8_45, %c0_46], %130 {strides = array<i32>} : memref<16x128xf32, #tpu.memory_space<vmem>>, vector<2x64xf32>,
    %c6_47 = arith.constant 6 : index
    %c64_48 = arith.constant 64 : index
    %212 = vector.load %arg12[%c6_47, %c64_48] : memref<16x128xf32, #tpu.memory_space<vmem>>, vector<2x64xf32>
    tpu.vector_store %arg12[%c6_47, %c64_48], %130 {strides = array<i32>} : memref<16x128xf32, #tpu.memory_space<vmem>>, vector<2x64xf32>,
    %c10_49 = arith.constant 10 : index
    %c0_50 = arith.constant 0 : index
    %213 = vector.load %arg12[%c10_49, %c0_50] : memref<16x128xf32, #tpu.memory_space<vmem>>, vector<2x64xf32>
    tpu.vector_store %arg12[%c10_49, %c0_50], %154 {strides = array<i32>} : memref<16x128xf32, #tpu.memory_space<vmem>>, vector<2x64xf32>,
    %c4_51 = arith.constant 4 : index
    %c64_52 = arith.constant 64 : index
    %214 = vector.load %arg12[%c4_51, %c64_52] : memref<16x128xf32, #tpu.memory_space<vmem>>, vector<2x64xf32>
    tpu.vector_store %arg12[%c4_51, %c64_52], %154 {strides = array<i32>} : memref<16x128xf32, #tpu.memory_space<vmem>>, vector<2x64xf32>,
    %c12_53 = arith.constant 12 : index
    %c0_54 = arith.constant 0 : index
    %215 = vector.load %arg12[%c12_53, %c0_54] : memref<16x128xf32, #tpu.memory_space<vmem>>, vector<2x64xf32>
    tpu.vector_store %arg12[%c12_53, %c0_54], %178 {strides = array<i32>} : memref<16x128xf32, #tpu.memory_space<vmem>>, vector<2x64xf32>,
    %c2_55 = arith.constant 2 : index
    %c64_56 = arith.constant 64 : index
    %216 = vector.load %arg12[%c2_55, %c64_56] : memref<16x128xf32, #tpu.memory_space<vmem>>, vector<2x64xf32>
    tpu.vector_store %arg12[%c2_55, %c64_56], %178 {strides = array<i32>} : memref<16x128xf32, #tpu.memory_space<vmem>>, vector<2x64xf32>,
    %c14_57 = arith.constant 14 : index
    %c0_58 = arith.constant 0 : index
    %217 = vector.load %arg12[%c14_57, %c0_58] : memref<16x128xf32, #tpu.memory_space<vmem>>, vector<2x64xf32>
    tpu.vector_store %arg12[%c14_57, %c0_58], %202 {strides = array<i32>} : memref<16x128xf32, #tpu.memory_space<vmem>>, vector<2x64xf32>,
    %c0_59 = arith.constant 0 : index
    %c64_60 = arith.constant 64 : index
    %218 = vector.load %arg12[%c0_59, %c64_60] : memref<16x128xf32, #tpu.memory_space<vmem>>, vector<2x64xf32>
    tpu.vector_store %arg12[%c0_59, %c64_60], %202 {strides = array<i32>} : memref<16x128xf32, #tpu.memory_space<vmem>>, vector<2x64xf32>,
    %c0_61 = arith.constant 0 : index
    %c0_62 = arith.constant 0 : index
    %219 = vector.load %arg12[%c0_61, %c0_62] : memref<16x128xf32, #tpu.memory_space<vmem>>, vector<16x128xf32>
    %c0_63 = arith.constant 0 : index
    %c0_64 = arith.constant 0 : index
    %220 = vector.load %arg6[%c0_63, %c0_64] : memref<128x256xf32, #tpu.memory_space<vmem>>, vector<128x256xf32>
    %cst_65 = arith.constant dense<0.000000e+00> : vector<16x256xf32>
    %221 = tpu.matmul %219, %220, %cst_65 {dimension_numbers = #tpu.dot_dimension_numbers<[1], [0], [0], [1], [0, 0, 1, 1], [], []>} : vector<16x128xf32>, vector<128x256xf32>, vector<16x256xf32> -> vector<16x256xf32>
    %c0_66 = arith.constant 0 : index
    %c0_67 = arith.constant 0 : index
    %222 = vector.load %arg8[%c0_66, %c0_67] : memref<1x256xf32, #tpu.memory_space<vmem>>, vector<1x256xf32>
    %223 = vector.broadcast %222 : vector<1x256xf32> to vector<16x256xf32>
    %224 = arith.addf %221, %223 : vector<16x256xf32>
    %c0_68 = arith.constant 0 : index
    %c0_69 = arith.constant 0 : index
    %225 = vector.load %arg7[%c0_68, %c0_69] : memref<64x256xf32, #tpu.memory_space<vmem>>, vector<64x256xf32>
    %c1 = arith.constant 1 : index
    %c0_70 = arith.constant 0 : index
    %c0_71 = arith.constant 0 : index
    %226 = vector.load %arg1[%c1, %c0_70, %c0_71] : memref<2x2x64xf32, #tpu.memory_space<vmem>>, vector<1x2x64xf32>
    %227 = vector.shape_cast %226 : vector<1x2x64xf32> to vector<2x64xf32>
    %c1_72 = arith.constant 1 : index
    %c0_73 = arith.constant 0 : index
    %c0_74 = arith.constant 0 : index
    %228 = vector.load %arg2[%c1_72, %c0_73, %c0_74] : memref<2x2x64xf32, #tpu.memory_space<vmem>>, vector<1x2x64xf32>
    %229 = vector.shape_cast %228 : vector<1x2x64xf32> to vector<2x64xf32>
    %cst_75 = arith.constant dense<0.000000e+00> : vector<2x256xf32>
    %230 = tpu.matmul %227, %225, %cst_75 {dimension_numbers = #tpu.dot_dimension_numbers<[1], [0], [0], [1], [0, 0, 1, 1], [], []>} : vector<2x64xf32>, vector<64x256xf32>, vector<2x256xf32> -> vector<2x256xf32>
    %231 = vector.extract_strided_slice %224 {offsets = [0, 0], sizes = [2, 256], strides = [1, 1]} : vector<16x256xf32> to vector<2x256xf32>
    %232 = arith.addf %231, %230 : vector<2x256xf32>
    %233 = vector.extract_strided_slice %232 {offsets = [0, 0], sizes = [2, 128], strides = [1, 1]} : vector<2x256xf32> to vector<2x128xf32>
    %234 = arith.negf %233 : vector<2x128xf32>
    %235 = math.exp %234 : vector<2x128xf32>
    %cst_76 = arith.constant 1.000000e+00 : f32
    %236 = vector.broadcast %cst_76 : f32 to vector<2x128xf32>
    %237 = arith.addf %236, %235 : vector<2x128xf32>
    %238 = arith.divf %236, %237 : vector<2x128xf32>
    %239 = vector.extract_strided_slice %232 {offsets = [0, 128], sizes = [2, 64], strides = [1, 1]} : vector<2x256xf32> to vector<2x64xf32>
    %240 = math.tanh %239 : vector<2x64xf32>
    %241 = vector.extract_strided_slice %232 {offsets = [0, 192], sizes = [2, 64], strides = [1, 1]} : vector<2x256xf32> to vector<2x64xf32>
    %242 = arith.negf %241 : vector<2x64xf32>
    %243 = math.exp %242 : vector<2x64xf32>
    %cst_77 = arith.constant 1.000000e+00 : f32
    %244 = vector.broadcast %cst_77 : f32 to vector<2x64xf32>
    %245 = arith.addf %244, %243 : vector<2x64xf32>
    %246 = arith.divf %244, %245 : vector<2x64xf32>
    %247 = vector.extract_strided_slice %238 {offsets = [0, 64], sizes = [2, 64], strides = [1, 1]} : vector<2x128xf32> to vector<2x64xf32>
    %248 = arith.mulf %247, %229 : vector<2x64xf32>
    %249 = vector.extract_strided_slice %238 {offsets = [0, 0], sizes = [2, 64], strides = [1, 1]} : vector<2x128xf32> to vector<2x64xf32>
    %250 = arith.mulf %249, %240 : vector<2x64xf32>
    %251 = arith.addf %248, %250 : vector<2x64xf32>
    %252 = math.tanh %251 : vector<2x64xf32>
    %253 = arith.mulf %246, %252 : vector<2x64xf32>
    %cst_78 = arith.constant dense<0.000000e+00> : vector<2x256xf32>
    %254 = tpu.matmul %253, %225, %cst_78 {dimension_numbers = #tpu.dot_dimension_numbers<[1], [0], [0], [1], [0, 0, 1, 1], [], []>} : vector<2x64xf32>, vector<64x256xf32>, vector<2x256xf32> -> vector<2x256xf32>
    %255 = vector.extract_strided_slice %224 {offsets = [2, 0], sizes = [2, 256], strides = [1, 1]} : vector<16x256xf32> to vector<2x256xf32>
    %256 = arith.addf %255, %254 : vector<2x256xf32>
    %257 = vector.extract_strided_slice %256 {offsets = [0, 0], sizes = [2, 128], strides = [1, 1]} : vector<2x256xf32> to vector<2x128xf32>
    %258 = arith.negf %257 : vector<2x128xf32>
    %259 = math.exp %258 : vector<2x128xf32>
    %cst_79 = arith.constant 1.000000e+00 : f32
    %260 = vector.broadcast %cst_79 : f32 to vector<2x128xf32>
    %261 = arith.addf %260, %259 : vector<2x128xf32>
    %262 = arith.divf %260, %261 : vector<2x128xf32>
    %263 = vector.extract_strided_slice %256 {offsets = [0, 128], sizes = [2, 64], strides = [1, 1]} : vector<2x256xf32> to vector<2x64xf32>
    %264 = math.tanh %263 : vector<2x64xf32>
    %265 = vector.extract_strided_slice %256 {offsets = [0, 192], sizes = [2, 64], strides = [1, 1]} : vector<2x256xf32> to vector<2x64xf32>
    %266 = arith.negf %265 : vector<2x64xf32>
    %267 = math.exp %266 : vector<2x64xf32>
    %cst_80 = arith.constant 1.000000e+00 : f32
    %268 = vector.broadcast %cst_80 : f32 to vector<2x64xf32>
    %269 = arith.addf %268, %267 : vector<2x64xf32>
    %270 = arith.divf %268, %269 : vector<2x64xf32>
    %271 = vector.extract_strided_slice %262 {offsets = [0, 64], sizes = [2, 64], strides = [1, 1]} : vector<2x128xf32> to vector<2x64xf32>
    %272 = arith.mulf %271, %251 : vector<2x64xf32>
    %273 = vector.extract_strided_slice %262 {offsets = [0, 0], sizes = [2, 64], strides = [1, 1]} : vector<2x128xf32> to vector<2x64xf32>
    %274 = arith.mulf %273, %264 : vector<2x64xf32>
    %275 = arith.addf %272, %274 : vector<2x64xf32>
    %276 = math.tanh %275 : vector<2x64xf32>
    %277 = arith.mulf %270, %276 : vector<2x64xf32>
    %cst_81 = arith.constant dense<0.000000e+00> : vector<2x256xf32>
    %278 = tpu.matmul %277, %225, %cst_81 {dimension_numbers = #tpu.dot_dimension_numbers<[1], [0], [0], [1], [0, 0, 1, 1], [], []>} : vector<2x64xf32>, vector<64x256xf32>, vector<2x256xf32> -> vector<2x256xf32>
    %279 = vector.extract_strided_slice %224 {offsets = [4, 0], sizes = [2, 256], strides = [1, 1]} : vector<16x256xf32> to vector<2x256xf32>
    %280 = arith.addf %279, %278 : vector<2x256xf32>
    %281 = vector.extract_strided_slice %280 {offsets = [0, 0], sizes = [2, 128], strides = [1, 1]} : vector<2x256xf32> to vector<2x128xf32>
    %282 = arith.negf %281 : vector<2x128xf32>
    %283 = math.exp %282 : vector<2x128xf32>
    %cst_82 = arith.constant 1.000000e+00 : f32
    %284 = vector.broadcast %cst_82 : f32 to vector<2x128xf32>
    %285 = arith.addf %284, %283 : vector<2x128xf32>
    %286 = arith.divf %284, %285 : vector<2x128xf32>
    %287 = vector.extract_strided_slice %280 {offsets = [0, 128], sizes = [2, 64], strides = [1, 1]} : vector<2x256xf32> to vector<2x64xf32>
    %288 = math.tanh %287 : vector<2x64xf32>
    %289 = vector.extract_strided_slice %280 {offsets = [0, 192], sizes = [2, 64], strides = [1, 1]} : vector<2x256xf32> to vector<2x64xf32>
    %290 = arith.negf %289 : vector<2x64xf32>
    %291 = math.exp %290 : vector<2x64xf32>
    %cst_83 = arith.constant 1.000000e+00 : f32
    %292 = vector.broadcast %cst_83 : f32 to vector<2x64xf32>
    %293 = arith.addf %292, %291 : vector<2x64xf32>
    %294 = arith.divf %292, %293 : vector<2x64xf32>
    %295 = vector.extract_strided_slice %286 {offsets = [0, 64], sizes = [2, 64], strides = [1, 1]} : vector<2x128xf32> to vector<2x64xf32>
    %296 = arith.mulf %295, %275 : vector<2x64xf32>
    %297 = vector.extract_strided_slice %286 {offsets = [0, 0], sizes = [2, 64], strides = [1, 1]} : vector<2x128xf32> to vector<2x64xf32>
    %298 = arith.mulf %297, %288 : vector<2x64xf32>
    %299 = arith.addf %296, %298 : vector<2x64xf32>
    %300 = math.tanh %299 : vector<2x64xf32>
    %301 = arith.mulf %294, %300 : vector<2x64xf32>
    %cst_84 = arith.constant dense<0.000000e+00> : vector<2x256xf32>
    %302 = tpu.matmul %301, %225, %cst_84 {dimension_numbers = #tpu.dot_dimension_numbers<[1], [0], [0], [1], [0, 0, 1, 1], [], []>} : vector<2x64xf32>, vector<64x256xf32>, vector<2x256xf32> -> vector<2x256xf32>
    %303 = vector.extract_strided_slice %224 {offsets = [6, 0], sizes = [2, 256], strides = [1, 1]} : vector<16x256xf32> to vector<2x256xf32>
    %304 = arith.addf %303, %302 : vector<2x256xf32>
    %305 = vector.extract_strided_slice %304 {offsets = [0, 0], sizes = [2, 128], strides = [1, 1]} : vector<2x256xf32> to vector<2x128xf32>
    %306 = arith.negf %305 : vector<2x128xf32>
    %307 = math.exp %306 : vector<2x128xf32>
    %cst_85 = arith.constant 1.000000e+00 : f32
    %308 = vector.broadcast %cst_85 : f32 to vector<2x128xf32>
    %309 = arith.addf %308, %307 : vector<2x128xf32>
    %310 = arith.divf %308, %309 : vector<2x128xf32>
    %311 = vector.extract_strided_slice %304 {offsets = [0, 128], sizes = [2, 64], strides = [1, 1]} : vector<2x256xf32> to vector<2x64xf32>
    %312 = math.tanh %311 : vector<2x64xf32>
    %313 = vector.extract_strided_slice %304 {offsets = [0, 192], sizes = [2, 64], strides = [1, 1]} : vector<2x256xf32> to vector<2x64xf32>
    %314 = arith.negf %313 : vector<2x64xf32>
    %315 = math.exp %314 : vector<2x64xf32>
    %cst_86 = arith.constant 1.000000e+00 : f32
    %316 = vector.broadcast %cst_86 : f32 to vector<2x64xf32>
    %317 = arith.addf %316, %315 : vector<2x64xf32>
    %318 = arith.divf %316, %317 : vector<2x64xf32>
    %319 = vector.extract_strided_slice %310 {offsets = [0, 64], sizes = [2, 64], strides = [1, 1]} : vector<2x128xf32> to vector<2x64xf32>
    %320 = arith.mulf %319, %299 : vector<2x64xf32>
    %321 = vector.extract_strided_slice %310 {offsets = [0, 0], sizes = [2, 64], strides = [1, 1]} : vector<2x128xf32> to vector<2x64xf32>
    %322 = arith.mulf %321, %312 : vector<2x64xf32>
    %323 = arith.addf %320, %322 : vector<2x64xf32>
    %324 = math.tanh %323 : vector<2x64xf32>
    %325 = arith.mulf %318, %324 : vector<2x64xf32>
    %cst_87 = arith.constant dense<0.000000e+00> : vector<2x256xf32>
    %326 = tpu.matmul %325, %225, %cst_87 {dimension_numbers = #tpu.dot_dimension_numbers<[1], [0], [0], [1], [0, 0, 1, 1], [], []>} : vector<2x64xf32>, vector<64x256xf32>, vector<2x256xf32> -> vector<2x256xf32>
    %327 = vector.extract_strided_slice %224 {offsets = [8, 0], sizes = [2, 256], strides = [1, 1]} : vector<16x256xf32> to vector<2x256xf32>
    %328 = arith.addf %327, %326 : vector<2x256xf32>
    %329 = vector.extract_strided_slice %328 {offsets = [0, 0], sizes = [2, 128], strides = [1, 1]} : vector<2x256xf32> to vector<2x128xf32>
    %330 = arith.negf %329 : vector<2x128xf32>
    %331 = math.exp %330 : vector<2x128xf32>
    %cst_88 = arith.constant 1.000000e+00 : f32
    %332 = vector.broadcast %cst_88 : f32 to vector<2x128xf32>
    %333 = arith.addf %332, %331 : vector<2x128xf32>
    %334 = arith.divf %332, %333 : vector<2x128xf32>
    %335 = vector.extract_strided_slice %328 {offsets = [0, 128], sizes = [2, 64], strides = [1, 1]} : vector<2x256xf32> to vector<2x64xf32>
    %336 = math.tanh %335 : vector<2x64xf32>
    %337 = vector.extract_strided_slice %328 {offsets = [0, 192], sizes = [2, 64], strides = [1, 1]} : vector<2x256xf32> to vector<2x64xf32>
    %338 = arith.negf %337 : vector<2x64xf32>
    %339 = math.exp %338 : vector<2x64xf32>
    %cst_89 = arith.constant 1.000000e+00 : f32
    %340 = vector.broadcast %cst_89 : f32 to vector<2x64xf32>
    %341 = arith.addf %340, %339 : vector<2x64xf32>
    %342 = arith.divf %340, %341 : vector<2x64xf32>
    %343 = vector.extract_strided_slice %334 {offsets = [0, 64], sizes = [2, 64], strides = [1, 1]} : vector<2x128xf32> to vector<2x64xf32>
    %344 = arith.mulf %343, %323 : vector<2x64xf32>
    %345 = vector.extract_strided_slice %334 {offsets = [0, 0], sizes = [2, 64], strides = [1, 1]} : vector<2x128xf32> to vector<2x64xf32>
    %346 = arith.mulf %345, %336 : vector<2x64xf32>
    %347 = arith.addf %344, %346 : vector<2x64xf32>
    %348 = math.tanh %347 : vector<2x64xf32>
    %349 = arith.mulf %342, %348 : vector<2x64xf32>
    %cst_90 = arith.constant dense<0.000000e+00> : vector<2x256xf32>
    %350 = tpu.matmul %349, %225, %cst_90 {dimension_numbers = #tpu.dot_dimension_numbers<[1], [0], [0], [1], [0, 0, 1, 1], [], []>} : vector<2x64xf32>, vector<64x256xf32>, vector<2x256xf32> -> vector<2x256xf32>
    %351 = vector.extract_strided_slice %224 {offsets = [10, 0], sizes = [2, 256], strides = [1, 1]} : vector<16x256xf32> to vector<2x256xf32>
    %352 = arith.addf %351, %350 : vector<2x256xf32>
    %353 = vector.extract_strided_slice %352 {offsets = [0, 0], sizes = [2, 128], strides = [1, 1]} : vector<2x256xf32> to vector<2x128xf32>
    %354 = arith.negf %353 : vector<2x128xf32>
    %355 = math.exp %354 : vector<2x128xf32>
    %cst_91 = arith.constant 1.000000e+00 : f32
    %356 = vector.broadcast %cst_91 : f32 to vector<2x128xf32>
    %357 = arith.addf %356, %355 : vector<2x128xf32>
    %358 = arith.divf %356, %357 : vector<2x128xf32>
    %359 = vector.extract_strided_slice %352 {offsets = [0, 128], sizes = [2, 64], strides = [1, 1]} : vector<2x256xf32> to vector<2x64xf32>
    %360 = math.tanh %359 : vector<2x64xf32>
    %361 = vector.extract_strided_slice %352 {offsets = [0, 192], sizes = [2, 64], strides = [1, 1]} : vector<2x256xf32> to vector<2x64xf32>
    %362 = arith.negf %361 : vector<2x64xf32>
    %363 = math.exp %362 : vector<2x64xf32>
    %cst_92 = arith.constant 1.000000e+00 : f32
    %364 = vector.broadcast %cst_92 : f32 to vector<2x64xf32>
    %365 = arith.addf %364, %363 : vector<2x64xf32>
    %366 = arith.divf %364, %365 : vector<2x64xf32>
    %367 = vector.extract_strided_slice %358 {offsets = [0, 64], sizes = [2, 64], strides = [1, 1]} : vector<2x128xf32> to vector<2x64xf32>
    %368 = arith.mulf %367, %347 : vector<2x64xf32>
    %369 = vector.extract_strided_slice %358 {offsets = [0, 0], sizes = [2, 64], strides = [1, 1]} : vector<2x128xf32> to vector<2x64xf32>
    %370 = arith.mulf %369, %360 : vector<2x64xf32>
    %371 = arith.addf %368, %370 : vector<2x64xf32>
    %372 = math.tanh %371 : vector<2x64xf32>
    %373 = arith.mulf %366, %372 : vector<2x64xf32>
    %cst_93 = arith.constant dense<0.000000e+00> : vector<2x256xf32>
    %374 = tpu.matmul %373, %225, %cst_93 {dimension_numbers = #tpu.dot_dimension_numbers<[1], [0], [0], [1], [0, 0, 1, 1], [], []>} : vector<2x64xf32>, vector<64x256xf32>, vector<2x256xf32> -> vector<2x256xf32>
    %375 = vector.extract_strided_slice %224 {offsets = [12, 0], sizes = [2, 256], strides = [1, 1]} : vector<16x256xf32> to vector<2x256xf32>
    %376 = arith.addf %375, %374 : vector<2x256xf32>
    %377 = vector.extract_strided_slice %376 {offsets = [0, 0], sizes = [2, 128], strides = [1, 1]} : vector<2x256xf32> to vector<2x128xf32>
    %378 = arith.negf %377 : vector<2x128xf32>
    %379 = math.exp %378 : vector<2x128xf32>
    %cst_94 = arith.constant 1.000000e+00 : f32
    %380 = vector.broadcast %cst_94 : f32 to vector<2x128xf32>
    %381 = arith.addf %380, %379 : vector<2x128xf32>
    %382 = arith.divf %380, %381 : vector<2x128xf32>
    %383 = vector.extract_strided_slice %376 {offsets = [0, 128], sizes = [2, 64], strides = [1, 1]} : vector<2x256xf32> to vector<2x64xf32>
    %384 = math.tanh %383 : vector<2x64xf32>
    %385 = vector.extract_strided_slice %376 {offsets = [0, 192], sizes = [2, 64], strides = [1, 1]} : vector<2x256xf32> to vector<2x64xf32>
    %386 = arith.negf %385 : vector<2x64xf32>
    %387 = math.exp %386 : vector<2x64xf32>
    %cst_95 = arith.constant 1.000000e+00 : f32
    %388 = vector.broadcast %cst_95 : f32 to vector<2x64xf32>
    %389 = arith.addf %388, %387 : vector<2x64xf32>
    %390 = arith.divf %388, %389 : vector<2x64xf32>
    %391 = vector.extract_strided_slice %382 {offsets = [0, 64], sizes = [2, 64], strides = [1, 1]} : vector<2x128xf32> to vector<2x64xf32>
    %392 = arith.mulf %391, %371 : vector<2x64xf32>
    %393 = vector.extract_strided_slice %382 {offsets = [0, 0], sizes = [2, 64], strides = [1, 1]} : vector<2x128xf32> to vector<2x64xf32>
    %394 = arith.mulf %393, %384 : vector<2x64xf32>
    %395 = arith.addf %392, %394 : vector<2x64xf32>
    %396 = math.tanh %395 : vector<2x64xf32>
    %397 = arith.mulf %390, %396 : vector<2x64xf32>
    %cst_96 = arith.constant dense<0.000000e+00> : vector<2x256xf32>
    %398 = tpu.matmul %397, %225, %cst_96 {dimension_numbers = #tpu.dot_dimension_numbers<[1], [0], [0], [1], [0, 0, 1, 1], [], []>} : vector<2x64xf32>, vector<64x256xf32>, vector<2x256xf32> -> vector<2x256xf32>
    %399 = vector.extract_strided_slice %224 {offsets = [14, 0], sizes = [2, 256], strides = [1, 1]} : vector<16x256xf32> to vector<2x256xf32>
    %400 = arith.addf %399, %398 : vector<2x256xf32>
    %401 = vector.extract_strided_slice %400 {offsets = [0, 0], sizes = [2, 128], strides = [1, 1]} : vector<2x256xf32> to vector<2x128xf32>
    %402 = arith.negf %401 : vector<2x128xf32>
    %403 = math.exp %402 : vector<2x128xf32>
    %cst_97 = arith.constant 1.000000e+00 : f32
    %404 = vector.broadcast %cst_97 : f32 to vector<2x128xf32>
    %405 = arith.addf %404, %403 : vector<2x128xf32>
    %406 = arith.divf %404, %405 : vector<2x128xf32>
    %407 = vector.extract_strided_slice %400 {offsets = [0, 128], sizes = [2, 64], strides = [1, 1]} : vector<2x256xf32> to vector<2x64xf32>
    %408 = math.tanh %407 : vector<2x64xf32>
    %409 = vector.extract_strided_slice %400 {offsets = [0, 192], sizes = [2, 64], strides = [1, 1]} : vector<2x256xf32> to vector<2x64xf32>
    %410 = arith.negf %409 : vector<2x64xf32>
    %411 = math.exp %410 : vector<2x64xf32>
    %cst_98 = arith.constant 1.000000e+00 : f32
    %412 = vector.broadcast %cst_98 : f32 to vector<2x64xf32>
    %413 = arith.addf %412, %411 : vector<2x64xf32>
    %414 = arith.divf %412, %413 : vector<2x64xf32>
    %415 = vector.extract_strided_slice %406 {offsets = [0, 64], sizes = [2, 64], strides = [1, 1]} : vector<2x128xf32> to vector<2x64xf32>
    %416 = arith.mulf %415, %395 : vector<2x64xf32>
    %417 = vector.extract_strided_slice %406 {offsets = [0, 0], sizes = [2, 64], strides = [1, 1]} : vector<2x128xf32> to vector<2x64xf32>
    %418 = arith.mulf %417, %408 : vector<2x64xf32>
    %419 = arith.addf %416, %418 : vector<2x64xf32>
    %420 = math.tanh %419 : vector<2x64xf32>
    %421 = arith.mulf %414, %420 : vector<2x64xf32>
    %422 = vector.extract_strided_slice %421 {offsets = [0, 0], sizes = [2, 32], strides = [1, 1]} : vector<2x64xf32> to vector<2x32xf32>
    %423 = vector.extract_strided_slice %253 {offsets = [0, 32], sizes = [2, 32], strides = [1, 1]} : vector<2x64xf32> to vector<2x32xf32>
    %424 = arith.addf %422, %423 : vector<2x32xf32>
    %cst_99 = arith.constant 5.000000e-01 : f32
    %425 = vector.broadcast %cst_99 : f32 to vector<2x32xf32>
    %426 = arith.mulf %425, %424 : vector<2x32xf32>
    %c0_100 = arith.constant 0 : index
    %c0_101 = arith.constant 0 : index
    %427 = vector.load %arg9[%c0_100, %c0_101] : memref<32x4xf32, #tpu.memory_space<vmem>>, vector<32x4xf32>
    %cst_102 = arith.constant dense<0.000000e+00> : vector<2x4xf32>
    %428 = tpu.matmul %426, %427, %cst_102 {dimension_numbers = #tpu.dot_dimension_numbers<[1], [0], [0], [1], [0, 0, 1, 1], [], []>} : vector<2x32xf32>, vector<32x4xf32>, vector<2x4xf32> -> vector<2x4xf32>
    %c0_103 = arith.constant 0 : index
    %c0_104 = arith.constant 0 : index
    %429 = vector.load %arg10[%c0_103, %c0_104] : memref<1x4xf32, #tpu.memory_space<vmem>>, vector<1x4xf32>
    %430 = vector.broadcast %429 : vector<1x4xf32> to vector<2x4xf32>
    %431 = arith.addf %428, %430 : vector<2x4xf32>
    %c0_105 = arith.constant 0 : index
    %c0_106 = arith.constant 0 : index
    %432 = vector.load %arg11[%c0_105, %c0_106] : memref<2x4xf32, #tpu.memory_space<vmem>>, vector<2x4xf32>
    tpu.vector_store %arg11[%c0_105, %c0_106], %431 {strides = array<i32>} : memref<2x4xf32, #tpu.memory_space<vmem>>, vector<2x4xf32>,
    return
  }
}

</mosaic_0001>

<llo_original>
// kernel: bilstm_forward.1
$region0: #{bilstm_forward.1}
  #allocation0 [shape = 'u32[]', space=smem, size = 0x4, offset = 0x4, fixed_abs, tag = 'smem constant byte address 0x4 - core index']
  #allocation1 [shape = 'u32[144,128]{1,0:T(1,128)}', space=vmem, size = 0x12000, scoped, tag = 'internal scratch']
  #allocation2 [shape = 'f32[16,128]{1,0:T(8,128)}', space=vmem, size = 0x2000, scoped, tag = 'scratch operand']
  %s0 = inlined_call_operand.vmem [shape: f32[16,32], index: 0, kind: input, shape index: {}]
  %s1 = inlined_call_operand.vmem [shape: f32[2,2,64], index: 1, kind: input, shape index: {}]
  %s2 = inlined_call_operand.vmem [shape: f32[2,2,64], index: 2, kind: input, shape index: {}]
  %s3 = inlined_call_operand.hbm [shape: f32[32,256], index: 3, kind: input, shape index: {}]
  %s4 = inlined_call_operand.hbm [shape: f32[64,256], index: 4, kind: input, shape index: {}]
  %s5 = inlined_call_operand.vmem [shape: f32[1,256], index: 5, kind: input, shape index: {}]
  %s6 = inlined_call_operand.vmem [shape: f32[128,256], index: 6, kind: input, shape index: {}]
  %s7 = inlined_call_operand.hbm [shape: f32[64,256], index: 7, kind: input, shape index: {}]
  %s8 = inlined_call_operand.vmem [shape: f32[1,256], index: 8, kind: input, shape index: {}]
  %s9 = inlined_call_operand.vmem [shape: f32[32,4], index: 9, kind: input, shape index: {}]
  %s10 = inlined_call_operand.vmem [shape: f32[1,4], index: 10, kind: input, shape index: {}]
  %s11 = inlined_call_operand.hbm [shape: f32[2,4], index: 11, kind: output, shape index: {}]
  %s12 = sld [smem:[#allocation0]]
  $region66: #{bilstm_forward.1} parent=0
    _
  %s14 = ssub.s32 1, %s12
  %s15 = scalar_select 0, %s14, %s12
  $region1: #{bilstm_forward.1} parent=0
    #allocation3 [shape = 'u8[32768]{0}', space=vmem, size = 0x8000, scoped, tag = 'input window, operand 3, single buffered']
    #allocation4 [shape = 's32[1]{0}', space=sflag, size = 0x4, scoped, tag = 'scoped memory for bilstm_forward.1']
    #allocation5 [shape = 's32[1]{0}', space=sflag, size = 0x4, scoped, tag = 'scoped memory for bilstm_forward.1']
    #allocation6 [shape = 'u8[65536]{0}', space=vmem, size = 0x10000, scoped, tag = 'input window, operand 4, single buffered']
    #allocation7 [shape = 's32[1]{0}', space=sflag, size = 0x4, scoped, tag = 'scoped memory for bilstm_forward.1']
    #allocation8 [shape = 'u8[65536]{0}', space=vmem, size = 0x10000, scoped, tag = 'input window, operand 7, single buffered']
    #allocation9 [shape = 'u8[1024]{0}', space=vmem, size = 0x400, scoped, tag = 'output window, operand 0, single buffered']
    %16 = vsyncpa [#allocation4], 0
    %17 = vsyncpa [#allocation7], 0
    %18 = vsyncpa [#allocation5], 0
    // Predicated region
    $region2: #{bilstm_forward.1} parent=1 // pred_check
      _
    $region3: #{bilstm_forward.1} parent=1 // pred_check_branch
      %20 = sbr.rel (0) target = $region5
    $region4: #{bilstm_forward.1} parent=1 // pred_region
      _
    $region5: #{bilstm_forward.1} parent=1 // pred_fallthru
      _
    // Predicated region
    $region6: #{bilstm_forward.1} parent=1 // pred_check
      _
    $region7: #{bilstm_forward.1} parent=1 // pred_check_branch
      %22 = sbr.rel (0) target = $region9
    $region8: #{bilstm_forward.1} parent=1 // pred_region
      _
    $region9: #{bilstm_forward.1} parent=1 // pred_fallthru
      _
    // Predicated region
    $region10: #{bilstm_forward.1} parent=1 // pred_check
      _
    $region11: #{bilstm_forward.1} parent=1 // pred_check_branch
      %24 = sbr.rel (0) target = $region13
    $region12: #{bilstm_forward.1} parent=1 // pred_region
      _
    $region13: #{bilstm_forward.1} parent=1 // pred_fallthru
      _
    // Predicated region
    $region14: #{bilstm_forward.1} parent=1 // pred_check
      _
    $region15: #{bilstm_forward.1} parent=1 // pred_check_branch
      %26 = sbr.rel (0) target = $region17
    $region16: #{bilstm_forward.1} parent=1 // pred_region
      %s28 = ssub.s32 1024, 1024
      %29 = vsyncadd [#allocation4], %s28
      %s30 = sshll.u32 [#allocation3], 4
      %s31 = int_to_ptr.vmem [resolvable:$true] %s30
      %36 = dma.hbm_to_vmem [thread:$0]  %s3, 1024, %s31, [#allocation4], 256, 256, 16
    $region17: #{bilstm_forward.1} parent=1 // pred_fallthru
      _
    // Predicated region
    $region18: #{bilstm_forward.1} parent=1 // pred_check
      _
    $region19: #{bilstm_forward.1} parent=1 // pred_check_branch
      %38 = sbr.rel (0) target = $region21
    $region20: #{bilstm_forward.1} parent=1 // pred_region
      %s40 = ssub.s32 2048, 2048
      %41 = vsyncadd [#allocation7], %s40
      %s42 = sshll.u32 [#allocation6], 4
      %s43 = int_to_ptr.vmem [resolvable:$true] %s42
      %48 = dma.hbm_to_vmem [thread:$0]  %s4, 2048, %s43, [#allocation7], 256, 256, 16
    $region21: #{bilstm_forward.1} parent=1 // pred_fallthru
      _
    // Predicated region
    $region22: #{bilstm_forward.1} parent=1 // pred_check
      _
    $region23: #{bilstm_forward.1} parent=1 // pred_check_branch
      %50 = sbr.rel (0) target = $region25
    $region24: #{bilstm_forward.1} parent=1 // pred_region
      _
    $region25: #{bilstm_forward.1} parent=1 // pred_fallthru
      _
    // Predicated region
    $region26: #{bilstm_forward.1} parent=1 // pred_check
      _
    $region27: #{bilstm_forward.1} parent=1 // pred_check_branch
      %52 = sbr.rel (0) target = $region29
    $region28: #{bilstm_forward.1} parent=1 // pred_region
      _
    $region29: #{bilstm_forward.1} parent=1 // pred_fallthru
      _
    // Predicated region
    $region30: #{bilstm_forward.1} parent=1 // pred_check
      _
    $region31: #{bilstm_forward.1} parent=1 // pred_check_branch
      %54 = sbr.rel (0) target = $region33
    $region32: #{bilstm_forward.1} parent=1 // pred_region
      %s56 = ssub.s32 2048, 2048
      %57 = vsyncadd [#allocation7], %s56
      %s58 = sshll.u32 [#allocation8], 4
      %s59 = int_to_ptr.vmem [resolvable:$true] %s58
      %64 = dma.hbm_to_vmem [thread:$0]  %s7, 2048, %s59, [#allocation7], 256, 256, 16
    $region33: #{bilstm_forward.1} parent=1 // pred_fallthru
      _
    // Predicated region
    $region34: #{bilstm_forward.1} parent=1 // pred_check
      _
    $region35: #{bilstm_forward.1} parent=1 // pred_check_branch
      %66 = sbr.rel (0) target = $region37
    $region36: #{bilstm_forward.1} parent=1 // pred_region
      _
    $region37: #{bilstm_forward.1} parent=1 // pred_fallthru
      _
    // Predicated region
    $region38: #{bilstm_forward.1} parent=1 // pred_check
      _
    $region39: #{bilstm_forward.1} parent=1 // pred_check_branch
      %68 = sbr.rel (0) target = $region41
    $region40: #{bilstm_forward.1} parent=1 // pred_region
      _
    $region41: #{bilstm_forward.1} parent=1 // pred_fallthru
      _
    // Predicated region
    $region42: #{bilstm_forward.1} parent=1 // pred_check
      _
    $region43: #{bilstm_forward.1} parent=1 // pred_check_branch
      %70 = sbr.rel (0) target = $region45
    $region44: #{bilstm_forward.1} parent=1 // pred_region
      _
    $region45: #{bilstm_forward.1} parent=1 // pred_fallthru
      _
    // Predicated region
    $region46: #{bilstm_forward.1} parent=1 // pred_check
      _
    $region47: #{bilstm_forward.1} parent=1 // pred_check_branch
      %72 = sbr.rel (0) target = $region49
    $region48: #{bilstm_forward.1} parent=1 // pred_region
      %73 = dma.done [#allocation4], 1024
    $region49: #{bilstm_forward.1} parent=1 // pred_fallthru
      _
    // Predicated region
    $region50: #{bilstm_forward.1} parent=1 // pred_check
      _
    $region51: #{bilstm_forward.1} parent=1 // pred_check_branch
      %75 = sbr.rel (0) target = $region53
    $region52: #{bilstm_forward.1} parent=1 // pred_region
      %76 = dma.done [#allocation7], 2048
    $region53: #{bilstm_forward.1} parent=1 // pred_fallthru
      _
    // Predicated region
    $region54: #{bilstm_forward.1} parent=1 // pred_check
      _
    $region55: #{bilstm_forward.1} parent=1 // pred_check_branch
      %78 = sbr.rel (0) target = $region57
    $region56: #{bilstm_forward.1} parent=1 // pred_region
      %79 = dma.done [#allocation7], 2048
    $region57: #{bilstm_forward.1} parent=1 // pred_fallthru
      _
    %v80 = vld [vmem:[%s0] sm:$0xff]
    %v81 = vld [vmem:[%s0 + $0x8] sm:$0xff]
    %v82 = vld [vmem:[#allocation3] sm:$0xff]
    %v83 = vld [vmem:[#allocation3 + $0x8] sm:$0xff]
    %v84 = vld [vmem:[#allocation3 + $0x10] sm:$0xff]
    %v85 = vld [vmem:[#allocation3 + $0x18] sm:$0xff]
    %v86 = vld [vmem:[#allocation3 + $0x20] sm:$0xff]
    %v87 = vld [vmem:[#allocation3 + $0x28] sm:$0xff]
    %v88 = vld [vmem:[#allocation3 + $0x30] sm:$0xff]
    %v89 = vld [vmem:[#allocation3 + $0x38] sm:$0xff]
    %v90 = vld [vmem:[%s5] sm:$0x3]
    %v92 = vlaneseq
    %v93 = vshrl.u32 %v92, 7
    %v94 = vsub.s32 0, %v93
    %v95 = vrot.slane %v90, %v94
    %v96 = vlaneseq
    %v97 = vshrl.u32 %v96, 7
    %v98 = vsub.s32 1, %v97
    %v99 = vrot.slane %v90, %v98
    %vm102 = vcmask 261120
    %v104 = vsel %vm102, %v80, 0
    %v107 = vsel %vm102, %v81, 0
    %109 = vmatprep.subr.mxu0 %v83
    %110 = vmatpush1.msra.mxu0 %v82
    %111 = vmatprep.subr.mxu0 %v85
    %112 = vmatpush1.msra.mxu0 %v84
    %113 = vmatprep.subr.mxu0 %v87
    %114 = vmatpush1.msra.mxu0 %v86
    %115 = vmatprep.subr.mxu0 %v89
    %116 = vmatpush1.msra.mxu0 %v88
    %117 = vmatprep.subr.mxu0 0.0
    %118 = vmatpush1.msra.mxu0 0.0
    %119 = vmatprep.subr.mxu0 0.0
    %120 = vmatpush1.msra.mxu0 0.0
    %121 = vmatprep.subr.mxu0 0.0
    %122 = vmatpush1.msra.mxu0 0.0
    %123 = vmatprep.subr.mxu0 0.0
    %124 = vmatpush1.msra.mxu0 0.0
    %125 = vmatprep.subr.mxu0 0.0
    %126 = vmatpush1.msra.mxu0 0.0
    %127 = vmatprep.subr.mxu0 0.0
    %128 = vmatpush1.msra.mxu0 0.0
    %129 = vmatprep.subr.mxu0 0.0
    %130 = vmatpush1.msra.mxu0 0.0
    %131 = vmatprep.subr.mxu0 0.0
    %132 = vmatpush1.msra.mxu0 0.0
    %133 = vmatprep.subr.mxu0 0.0
    %134 = vmatpush1.msra.mxu0 0.0
    %135 = vmatprep.subr.mxu0 0.0
    %136 = vmatpush1.msra.mxu0 0.0
    %137 = vmatprep.subr.mxu0 0.0
    %138 = vmatpush1.msra.mxu0 0.0
    %139 = vmatprep.subr.mxu0 0.0
    %140 = vmatpush1.msra.mxu0 0.0
    %141 = vmatprep.subr.mxu0 0.0
    %142 = vmatpush1.msra.mxu0 0.0
    %143 = vmatprep.subr.mxu0 0.0
    %144 = vmatpush1.msra.mxu0 0.0
    %145 = vmatprep.subr.mxu0 0.0
    %146 = vmatpush1.msra.mxu0 0.0
    %147 = vmatprep.subr.mxu0 0.0
    %148 = vmatpush1.msra.mxu0 0.0
    %149 = vmatprep.subr.mxu0 0.0
    %150 = vmatpush1.msra.mxu0 0.0
    %151 = vmatprep.subr.mxu0 0.0
    %152 = vmatpush1.msra.mxu0 0.0
    %153 = vmatprep.subr.mxu0 0.0
    %154 = vmatpush1.msra.mxu0 0.0
    %155 = vmatprep.subr.mxu0 0.0
    %156 = vmatpush1.msra.mxu0 0.0
    %157 = vmatprep.subr.mxu0 0.0
    %158 = vmatpush1.msra.mxu0 0.0
    %159 = vmatprep.subr.mxu0 0.0
    %160 = vmatpush1.msra.mxu0 0.0
    %161 = vmatprep.subr.mxu0 0.0
    %162 = vmatpush1.msra.mxu0 0.0
    %163 = vmatprep.subr.mxu0 0.0
    %164 = vmatpush1.msra.mxu0 0.0
    %165 = vmatprep.subr.mxu0 0.0
    %166 = vmatpush1.msra.mxu0 0.0
    %167 = vmatprep.subr.mxu0 0.0
    %168 = vmatpush1.msra.mxu0 0.0
    %169 = vmatprep.subr.mxu0 0.0
    %170 = vmatpush1.msra.mxu0 0.0
    %171 = vmatprep.subr.mxu0 0.0
    %172 = vmatpush1.msra.mxu0 0.0
    %173 = vmatprep.mubr.f32.mxu0 0.0
    %174 = vmatmul.mubr.f32.gmra.mrb[0].mxu0 %v104
    %v175 = vpop.f32.mrb[0].mxu0
    %v176 = vadd.f32 %v95, %v175
    %v177 = vpop.f32.mrb[0].mxu0
    %v178 = vadd.f32 %v99, %v177
    %179 = vmatprep.mubr.f32.mxu0 0.0
    %180 = vmatmul.mubr.f32.gmra.mrb[0].mxu0 %v107
    %v181 = vpop.f32.mrb[0].mxu0
    %v182 = vadd.f32 %v95, %v181
    %v183 = vpop.f32.mrb[0].mxu0
    %v184 = vadd.f32 %v99, %v183
    %185 = vdwg.mxu0
    %v186 = vld [vmem:[#allocation6] sm:$0xff]
    %v187 = vld [vmem:[#allocation6 + $0x8] sm:$0xff]
    %v188 = vld [vmem:[#allocation6 + $0x10] sm:$0xff]
    %v189 = vld [vmem:[#allocation6 + $0x18] sm:$0xff]
    %v190 = vld [vmem:[#allocation6 + $0x20] sm:$0xff]
    %v191 = vld [vmem:[#allocation6 + $0x28] sm:$0xff]
    %v192 = vld [vmem:[#allocation6 + $0x30] sm:$0xff]
    %v193 = vld [vmem:[#allocation6 + $0x38] sm:$0xff]
    %v194 = vld [vmem:[#allocation6 + $0x40] sm:$0xff]
    %v195 = vld [vmem:[#allocation6 + $0x48] sm:$0xff]
    %v196 = vld [vmem:[#allocation6 + $0x50] sm:$0xff]
    %v197 = vld [vmem:[#allocation6 + $0x58] sm:$0xff]
    %v198 = vld [vmem:[#allocation6 + $0x60] sm:$0xff]
    %v199 = vld [vmem:[#allocation6 + $0x68] sm:$0xff]
    %v200 = vld [vmem:[#allocation6 + $0x70] sm:$0xff]
    %v201 = vld [vmem:[#allocation6 + $0x78] sm:$0xff]
    %v202 = vld [vmem:[%s1] sm:$0x3]
    %v203 = vld [vmem:[%s2] sm:$0x3]
    %vm204 = vcmask 523264
    %v206 = vsel %vm204, %v202, 0
    %208 = vmatprep.subr.mxu0 %v187
    %209 = vmatpush1.msra.mxu0 %v186
    %210 = vmatprep.subr.mxu0 %v189
    %211 = vmatpush1.msra.mxu0 %v188
    %212 = vmatprep.subr.mxu0 %v191
    %213 = vmatpush1.msra.mxu0 %v190
    %214 = vmatprep.subr.mxu0 %v193
    %215 = vmatpush1.msra.mxu0 %v192
    %216 = vmatprep.subr.mxu0 %v195
    %217 = vmatpush1.msra.mxu0 %v194
    %218 = vmatprep.subr.mxu0 %v197
    %219 = vmatpush1.msra.mxu0 %v196
    %220 = vmatprep.subr.mxu0 %v199
    %221 = vmatpush1.msra.mxu0 %v198
    %222 = vmatprep.subr.mxu0 %v201
    %223 = vmatpush1.msra.mxu0 %v200
    %224 = vmatprep.subr.mxu0 0.0
    %225 = vmatpush1.msra.mxu0 0.0
    %226 = vmatprep.subr.mxu0 0.0
    %227 = vmatpush1.msra.mxu0 0.0
    %228 = vmatprep.subr.mxu0 0.0
    %229 = vmatpush1.msra.mxu0 0.0
    %230 = vmatprep.subr.mxu0 0.0
    %231 = vmatpush1.msra.mxu0 0.0
    %232 = vmatprep.subr.mxu0 0.0
    %233 = vmatpush1.msra.mxu0 0.0
    %234 = vmatprep.subr.mxu0 0.0
    %235 = vmatpush1.msra.mxu0 0.0
    %236 = vmatprep.subr.mxu0 0.0
    %237 = vmatpush1.msra.mxu0 0.0
    %238 = vmatprep.subr.mxu0 0.0
    %239 = vmatpush1.msra.mxu0 0.0
    %240 = vmatprep.subr.mxu0 0.0
    %241 = vmatpush1.msra.mxu0 0.0
    %242 = vmatprep.subr.mxu0 0.0
    %243 = vmatpush1.msra.mxu0 0.0
    %244 = vmatprep.subr.mxu0 0.0
    %245 = vmatpush1.msra.mxu0 0.0
    %246 = vmatprep.subr.mxu0 0.0
    %247 = vmatpush1.msra.mxu0 0.0
    %248 = vmatprep.subr.mxu0 0.0
    %249 = vmatpush1.msra.mxu0 0.0
    %250 = vmatprep.subr.mxu0 0.0
    %251 = vmatpush1.msra.mxu0 0.0
    %252 = vmatprep.subr.mxu0 0.0
    %253 = vmatpush1.msra.mxu0 0.0
    %254 = vmatprep.subr.mxu0 0.0
    %255 = vmatpush1.msra.mxu0 0.0
    %256 = vmatprep.subr.mxu0 0.0
    %257 = vmatpush1.msra.mxu0 0.0
    %258 = vmatprep.subr.mxu0 0.0
    %259 = vmatpush1.msra.mxu0 0.0
    %260 = vmatprep.subr.mxu0 0.0
    %261 = vmatpush1.msra.mxu0 0.0
    %262 = vmatprep.subr.mxu0 0.0
    %263 = vmatpush1.msra.mxu0 0.0
    %264 = vmatprep.subr.mxu0 0.0
    %265 = vmatpush1.msra.mxu0 0.0
    %266 = vmatprep.subr.mxu0 0.0
    %267 = vmatpush1.msra.mxu0 0.0
    %268 = vmatprep.subr.mxu0 0.0
    %269 = vmatpush1.msra.mxu0 0.0
    %270 = vmatprep.subr.mxu0 0.0
    %271 = vmatpush1.msra.mxu0 0.0
    %272 = vmatprep.mubr.f32.mxu0 0.0
    %273 = vmatmul.mubr.f32.gmra.mrb[0].mxu0 %v206
    %v274 = vpop.f32.mrb[0].mxu0
    %v275 = vadd.f32 0.0, %v274
    %v276 = vpop.f32.mrb[0].mxu0
    %v277 = vadd.f32 0.0, %v276
    %278 = vdwg.mxu0
    %v279 = vadd.f32 %v176, %v275
    %v280 = vadd.f32 %v178, %v277
    %v281 = vxor.u32 %v279, 2147483648
    %v282 = vmul.f32 %v281, 1.442695
    %v283 = vpow.pop %v282
    %v284 = vadd.f32 %v283, 1.0
    %v285 = vrcp.pop %v284
    %v286 = vmul.f32 1.0, %v285
    %v287 = vtanh.pop %v280
    %v288 = vxor.u32 %v280, 2147483648
    %v289 = vmul.f32 %v288, 1.442695
    %v290 = vpow.pop %v289
    %v291 = vadd.f32 %v290, 1.0
    %v292 = vrcp.pop %v291
    %v293 = vmul.f32 1.0, %v292
    %295 = vrot.lane.b32.xlu0 %v203, 64
    %v296 = vpop.permute.xlu0 %295
    %v298 = vmul.f32 %v286, %v296
    %v299 = vmul.f32 %v286, %v287
    %301 = vrot.lane.b32.xlu0 %v299, 64
    %v302 = vpop.permute.xlu0 %301
    %v304 = vadd.f32 %v298, %v302
    %v305 = vtanh.pop %v304
    %v306 = vmul.f32 %v293, %v305
    %308 = vrot.lane.b32.xlu0 %v306, 64
    %v309 = vpop.permute.xlu0 %308
    %v310 = vsel %vm204, %v309, 0
    %312 = vmatprep.subr.mxu0 %v187
    %313 = vmatpush1.msra.mxu0 %v186
    %314 = vmatprep.subr.mxu0 %v189
    %315 = vmatpush1.msra.mxu0 %v188
    %316 = vmatprep.subr.mxu0 %v191
    %317 = vmatpush1.msra.mxu0 %v190
    %318 = vmatprep.subr.mxu0 %v193
    %319 = vmatpush1.msra.mxu0 %v192
    %320 = vmatprep.subr.mxu0 %v195
    %321 = vmatpush1.msra.mxu0 %v194
    %322 = vmatprep.subr.mxu0 %v197
    %323 = vmatpush1.msra.mxu0 %v196
    %324 = vmatprep.subr.mxu0 %v199
    %325 = vmatpush1.msra.mxu0 %v198
    %326 = vmatprep.subr.mxu0 %v201
    %327 = vmatpush1.msra.mxu0 %v200
    %328 = vmatprep.subr.mxu0 0.0
    %329 = vmatpush1.msra.mxu0 0.0
    %330 = vmatprep.subr.mxu0 0.0
    %331 = vmatpush1.msra.mxu0 0.0
    %332 = vmatprep.subr.mxu0 0.0
    %333 = vmatpush1.msra.mxu0 0.0
    %334 = vmatprep.subr.mxu0 0.0
    %335 = vmatpush1.msra.mxu0 0.0
    %336 = vmatprep.subr.mxu0 0.0
    %337 = vmatpush1.msra.mxu0 0.0
    %338 = vmatprep.subr.mxu0 0.0
    %339 = vmatpush1.msra.mxu0 0.0
    %340 = vmatprep.subr.mxu0 0.0
    %341 = vmatpush1.msra.mxu0 0.0
    %342 = vmatprep.subr.mxu0 0.0
    %343 = vmatpush1.msra.mxu0 0.0
    %344 = vmatprep.subr.mxu0 0.0
    %345 = vmatpush1.msra.mxu0 0.0
    %346 = vmatprep.subr.mxu0 0.0
    %347 = vmatpush1.msra.mxu0 0.0
    %348 = vmatprep.subr.mxu0 0.0
    %349 = vmatpush1.msra.mxu0 0.0
    %350 = vmatprep.subr.mxu0 0.0
    %351 = vmatpush1.msra.mxu0 0.0
    %352 = vmatprep.subr.mxu0 0.0
    %353 = vmatpush1.msra.mxu0 0.0
    %354 = vmatprep.subr.mxu0 0.0
    %355 = vmatpush1.msra.mxu0 0.0
    %356 = vmatprep.subr.mxu0 0.0
    %357 = vmatpush1.msra.mxu0 0.0
    %358 = vmatprep.subr.mxu0 0.0
    %359 = vmatpush1.msra.mxu0 0.0
    %360 = vmatprep.subr.mxu0 0.0
    %361 = vmatpush1.msra.mxu0 0.0
    %362 = vmatprep.subr.mxu0 0.0
    %363 = vmatpush1.msra.mxu0 0.0
    %364 = vmatprep.subr.mxu0 0.0
    %365 = vmatpush1.msra.mxu0 0.0
    %366 = vmatprep.subr.mxu0 0.0
    %367 = vmatpush1.msra.mxu0 0.0
    %368 = vmatprep.subr.mxu0 0.0
    %369 = vmatpush1.msra.mxu0 0.0
    %370 = vmatprep.subr.mxu0 0.0
    %371 = vmatpush1.msra.mxu0 0.0
    %372 = vmatprep.subr.mxu0 0.0
    %373 = vmatpush1.msra.mxu0 0.0
    %374 = vmatprep.subr.mxu0 0.0
    %375 = vmatpush1.msra.mxu0 0.0
    %376 = vmatprep.mubr.f32.mxu0 0.0
    %377 = vmatmul.mubr.f32.gmra.mrb[0].mxu0 %v310
    %v378 = vpop.f32.mrb[0].mxu0
    %v379 = vadd.f32 0.0, %v378
    %v380 = vpop.f32.mrb[0].mxu0
    %v381 = vadd.f32 0.0, %v380
    %382 = vdwg.mxu0
    %v385 = vrot.slane %v379, 6
    %v386 = vrot.slane %v381, 6
    %v389 = vadd.f32 %v176, %v385
    %v390 = vadd.f32 %v178, %v386
    %v391 = vxor.u32 %v389, 2147483648
    %v392 = vmul.f32 %v391, 1.442695
    %v393 = vpow.pop %v392
    %v394 = vadd.f32 %v393, 1.0
    %v395 = vrcp.pop %v394
    %v396 = vmul.f32 1.0, %v395
    %v397 = vtanh.pop %v390
    %v398 = vxor.u32 %v390, 2147483648
    %v399 = vmul.f32 %v398, 1.442695
    %v400 = vpow.pop %v399
    %v401 = vadd.f32 %v400, 1.0
    %v402 = vrcp.pop %v401
    %v403 = vmul.f32 1.0, %v402
    %v405 = vrot.slane %v304, 6
    %v407 = vmul.f32 %v396, %v405
    %v408 = vmul.f32 %v396, %v397
    %410 = vrot.lane.b32.xlu0 %v408, 64
    %v411 = vpop.permute.xlu0 %410
    %v413 = vadd.f32 %v407, %v411
    %v414 = vtanh.pop %v413
    %v415 = vmul.f32 %v403, %v414
    %v417 = vrot.slane %v415, 2
    %418 = vrot.lane.b32.xlu0 %v417, 64
    %v419 = vpop.permute.xlu0 %418
    %v420 = vsel %vm204, %v419, 0
    %422 = vmatprep.subr.mxu0 %v187
    %423 = vmatpush1.msra.mxu0 %v186
    %424 = vmatprep.subr.mxu0 %v189
    %425 = vmatpush1.msra.mxu0 %v188
    %426 = vmatprep.subr.mxu0 %v191
    %427 = vmatpush1.msra.mxu0 %v190
    %428 = vmatprep.subr.mxu0 %v193
    %429 = vmatpush1.msra.mxu0 %v192
    %430 = vmatprep.subr.mxu0 %v195
    %431 = vmatpush1.msra.mxu0 %v194
    %432 = vmatprep.subr.mxu0 %v197
    %433 = vmatpush1.msra.mxu0 %v196
    %434 = vmatprep.subr.mxu0 %v199
    %435 = vmatpush1.msra.mxu0 %v198
    %436 = vmatprep.subr.mxu0 %v201
    %437 = vmatpush1.msra.mxu0 %v200
    %438 = vmatprep.subr.mxu0 0.0
    %439 = vmatpush1.msra.mxu0 0.0
    %440 = vmatprep.subr.mxu0 0.0
    %441 = vmatpush1.msra.mxu0 0.0
    %442 = vmatprep.subr.mxu0 0.0
    %443 = vmatpush1.msra.mxu0 0.0
    %444 = vmatprep.subr.mxu0 0.0
    %445 = vmatpush1.msra.mxu0 0.0
    %446 = vmatprep.subr.mxu0 0.0
    %447 = vmatpush1.msra.mxu0 0.0
    %448 = vmatprep.subr.mxu0 0.0
    %449 = vmatpush1.msra.mxu0 0.0
    %450 = vmatprep.subr.mxu0 0.0
    %451 = vmatpush1.msra.mxu0 0.0
    %452 = vmatprep.subr.mxu0 0.0
    %453 = vmatpush1.msra.mxu0 0.0
    %454 = vmatprep.subr.mxu0 0.0
    %455 = vmatpush1.msra.mxu0 0.0
    %456 = vmatprep.subr.mxu0 0.0
    %457 = vmatpush1.msra.mxu0 0.0
    %458 = vmatprep.subr.mxu0 0.0
    %459 = vmatpush1.msra.mxu0 0.0
    %460 = vmatprep.subr.mxu0 0.0
    %461 = vmatpush1.msra.mxu0 0.0
    %462 = vmatprep.subr.mxu0 0.0
    %463 = vmatpush1.msra.mxu0 0.0
    %464 = vmatprep.subr.mxu0 0.0
    %465 = vmatpush1.msra.mxu0 0.0
    %466 = vmatprep.subr.mxu0 0.0
    %467 = vmatpush1.msra.mxu0 0.0
    %468 = vmatprep.subr.mxu0 0.0
    %469 = vmatpush1.msra.mxu0 0.0
    %470 = vmatprep.subr.mxu0 0.0
    %471 = vmatpush1.msra.mxu0 0.0
    %472 = vmatprep.subr.mxu0 0.0
    %473 = vmatpush1.msra.mxu0 0.0
    %474 = vmatprep.subr.mxu0 0.0
    %475 = vmatpush1.msra.mxu0 0.0
    %476 = vmatprep.subr.mxu0 0.0
    %477 = vmatpush1.msra.mxu0 0.0
    %478 = vmatprep.subr.mxu0 0.0
    %479 = vmatpush1.msra.mxu0 0.0
    %480 = vmatprep.subr.mxu0 0.0
    %481 = vmatpush1.msra.mxu0 0.0
    %482 = vmatprep.subr.mxu0 0.0
    %483 = vmatpush1.msra.mxu0 0.0
    %484 = vmatprep.subr.mxu0 0.0
    %485 = vmatpush1.msra.mxu0 0.0
    %486 = vmatprep.mubr.f32.mxu0 0.0
    %487 = vmatmul.mubr.f32.gmra.mrb[0].mxu0 %v420
    %v488 = vpop.f32.mrb[0].mxu0
    %v489 = vadd.f32 0.0, %v488
    %v490 = vpop.f32.mrb[0].mxu0
    %v491 = vadd.f32 0.0, %v490
    %492 = vdwg.mxu0
    %v495 = vrot.slane %v489, 4
    %v496 = vrot.slane %v491, 4
    %v499 = vadd.f32 %v176, %v495
    %v500 = vadd.f32 %v178, %v496
    %v501 = vxor.u32 %v499, 2147483648
    %v502 = vmul.f32 %v501, 1.442695
    %v503 = vpow.pop %v502
    %v504 = vadd.f32 %v503, 1.0
    %v505 = vrcp.pop %v504
    %v506 = vmul.f32 1.0, %v505
    %v507 = vtanh.pop %v500
    %v508 = vxor.u32 %v500, 2147483648
    %v509 = vmul.f32 %v508, 1.442695
    %v510 = vpow.pop %v509
    %v511 = vadd.f32 %v510, 1.0
    %v512 = vrcp.pop %v511
    %v513 = vmul.f32 1.0, %v512
    %v515 = vrot.slane %v413, 6
    %v517 = vmul.f32 %v506, %v515
    %v518 = vmul.f32 %v506, %v507
    %520 = vrot.lane.b32.xlu0 %v518, 64
    %v521 = vpop.permute.xlu0 %520
    %v523 = vadd.f32 %v517, %v521
    %v524 = vtanh.pop %v523
    %v525 = vmul.f32 %v513, %v524
    %v527 = vrot.slane %v525, 4
    %528 = vrot.lane.b32.xlu0 %v527, 64
    %v529 = vpop.permute.xlu0 %528
    %v530 = vsel %vm204, %v529, 0
    %532 = vmatprep.subr.mxu0 %v187
    %533 = vmatpush1.msra.mxu0 %v186
    %534 = vmatprep.subr.mxu0 %v189
    %535 = vmatpush1.msra.mxu0 %v188
    %536 = vmatprep.subr.mxu0 %v191
    %537 = vmatpush1.msra.mxu0 %v190
    %538 = vmatprep.subr.mxu0 %v193
    %539 = vmatpush1.msra.mxu0 %v192
    %540 = vmatprep.subr.mxu0 %v195
    %541 = vmatpush1.msra.mxu0 %v194
    %542 = vmatprep.subr.mxu0 %v197
    %543 = vmatpush1.msra.mxu0 %v196
    %544 = vmatprep.subr.mxu0 %v199
    %545 = vmatpush1.msra.mxu0 %v198
    %546 = vmatprep.subr.mxu0 %v201
    %547 = vmatpush1.msra.mxu0 %v200
    %548 = vmatprep.subr.mxu0 0.0
    %549 = vmatpush1.msra.mxu0 0.0
    %550 = vmatprep.subr.mxu0 0.0
    %551 = vmatpush1.msra.mxu0 0.0
    %552 = vmatprep.subr.mxu0 0.0
    %553 = vmatpush1.msra.mxu0 0.0
    %554 = vmatprep.subr.mxu0 0.0
    %555 = vmatpush1.msra.mxu0 0.0
    %556 = vmatprep.subr.mxu0 0.0
    %557 = vmatpush1.msra.mxu0 0.0
    %558 = vmatprep.subr.mxu0 0.0
    %559 = vmatpush1.msra.mxu0 0.0
    %560 = vmatprep.subr.mxu0 0.0
    %561 = vmatpush1.msra.mxu0 0.0
    %562 = vmatprep.subr.mxu0 0.0
    %563 = vmatpush1.msra.mxu0 0.0
    %564 = vmatprep.subr.mxu0 0.0
    %565 = vmatpush1.msra.mxu0 0.0
    %566 = vmatprep.subr.mxu0 0.0
    %567 = vmatpush1.msra.mxu0 0.0
    %568 = vmatprep.subr.mxu0 0.0
    %569 = vmatpush1.msra.mxu0 0.0
    %570 = vmatprep.subr.mxu0 0.0
    %571 = vmatpush1.msra.mxu0 0.0
    %572 = vmatprep.subr.mxu0 0.0
    %573 = vmatpush1.msra.mxu0 0.0
    %574 = vmatprep.subr.mxu0 0.0
    %575 = vmatpush1.msra.mxu0 0.0
    %576 = vmatprep.subr.mxu0 0.0
    %577 = vmatpush1.msra.mxu0 0.0
    %578 = vmatprep.subr.mxu0 0.0
    %579 = vmatpush1.msra.mxu0 0.0
    %580 = vmatprep.subr.mxu0 0.0
    %581 = vmatpush1.msra.mxu0 0.0
    %582 = vmatprep.subr.mxu0 0.0
    %583 = vmatpush1.msra.mxu0 0.0
    %584 = vmatprep.subr.mxu0 0.0
    %585 = vmatpush1.msra.mxu0 0.0
    %586 = vmatprep.subr.mxu0 0.0
    %587 = vmatpush1.msra.mxu0 0.0
    %588 = vmatprep.subr.mxu0 0.0
    %589 = vmatpush1.msra.mxu0 0.0
    %590 = vmatprep.subr.mxu0 0.0
    %591 = vmatpush1.msra.mxu0 0.0
    %592 = vmatprep.subr.mxu0 0.0
    %593 = vmatpush1.msra.mxu0 0.0
    %594 = vmatprep.subr.mxu0 0.0
    %595 = vmatpush1.msra.mxu0 0.0
    %596 = vmatprep.mubr.f32.mxu0 0.0
    %597 = vmatmul.mubr.f32.gmra.mrb[0].mxu0 %v530
    %v598 = vpop.f32.mrb[0].mxu0
    %v599 = vadd.f32 0.0, %v598
    %v600 = vpop.f32.mrb[0].mxu0
    %v601 = vadd.f32 0.0, %v600
    %602 = vdwg.mxu0
    %v605 = vrot.slane %v599, 2
    %v606 = vrot.slane %v601, 2
    %v609 = vadd.f32 %v176, %v605
    %v610 = vadd.f32 %v178, %v606
    %v611 = vxor.u32 %v609, 2147483648
    %v612 = vmul.f32 %v611, 1.442695
    %v613 = vpow.pop %v612
    %v614 = vadd.f32 %v613, 1.0
    %v615 = vrcp.pop %v614
    %v616 = vmul.f32 1.0, %v615
    %v617 = vtanh.pop %v610
    %v618 = vxor.u32 %v610, 2147483648
    %v619 = vmul.f32 %v618, 1.442695
    %v620 = vpow.pop %v619
    %v621 = vadd.f32 %v620, 1.0
    %v622 = vrcp.pop %v621
    %v623 = vmul.f32 1.0, %v622
    %v625 = vrot.slane %v523, 6
    %v627 = vmul.f32 %v616, %v625
    %v628 = vmul.f32 %v616, %v617
    %630 = vrot.lane.b32.xlu0 %v628, 64
    %v631 = vpop.permute.xlu0 %630
    %v633 = vadd.f32 %v627, %v631
    %v634 = vtanh.pop %v633
    %v635 = vmul.f32 %v623, %v634
    %v637 = vrot.slane %v635, 6
    %638 = vrot.lane.b32.xlu0 %v637, 64
    %v639 = vpop.permute.xlu0 %638
    %v640 = vsel %vm204, %v639, 0
    %642 = vmatprep.subr.mxu0 %v187
    %643 = vmatpush1.msra.mxu0 %v186
    %644 = vmatprep.subr.mxu0 %v189
    %645 = vmatpush1.msra.mxu0 %v188
    %646 = vmatprep.subr.mxu0 %v191
    %647 = vmatpush1.msra.mxu0 %v190
    %648 = vmatprep.subr.mxu0 %v193
    %649 = vmatpush1.msra.mxu0 %v192
    %650 = vmatprep.subr.mxu0 %v195
    %651 = vmatpush1.msra.mxu0 %v194
    %652 = vmatprep.subr.mxu0 %v197
    %653 = vmatpush1.msra.mxu0 %v196
    %654 = vmatprep.subr.mxu0 %v199
    %655 = vmatpush1.msra.mxu0 %v198
    %656 = vmatprep.subr.mxu0 %v201
    %657 = vmatpush1.msra.mxu0 %v200
    %658 = vmatprep.subr.mxu0 0.0
    %659 = vmatpush1.msra.mxu0 0.0
    %660 = vmatprep.subr.mxu0 0.0
    %661 = vmatpush1.msra.mxu0 0.0
    %662 = vmatprep.subr.mxu0 0.0
    %663 = vmatpush1.msra.mxu0 0.0
    %664 = vmatprep.subr.mxu0 0.0
    %665 = vmatpush1.msra.mxu0 0.0
    %666 = vmatprep.subr.mxu0 0.0
    %667 = vmatpush1.msra.mxu0 0.0
    %668 = vmatprep.subr.mxu0 0.0
    %669 = vmatpush1.msra.mxu0 0.0
    %670 = vmatprep.subr.mxu0 0.0
    %671 = vmatpush1.msra.mxu0 0.0
    %672 = vmatprep.subr.mxu0 0.0
    %673 = vmatpush1.msra.mxu0 0.0
    %674 = vmatprep.subr.mxu0 0.0
    %675 = vmatpush1.msra.mxu0 0.0
    %676 = vmatprep.subr.mxu0 0.0
    %677 = vmatpush1.msra.mxu0 0.0
    %678 = vmatprep.subr.mxu0 0.0
    %679 = vmatpush1.msra.mxu0 0.0
    %680 = vmatprep.subr.mxu0 0.0
    %681 = vmatpush1.msra.mxu0 0.0
    %682 = vmatprep.subr.mxu0 0.0
    %683 = vmatpush1.msra.mxu0 0.0
    %684 = vmatprep.subr.mxu0 0.0
    %685 = vmatpush1.msra.mxu0 0.0
    %686 = vmatprep.subr.mxu0 0.0
    %687 = vmatpush1.msra.mxu0 0.0
    %688 = vmatprep.subr.mxu0 0.0
    %689 = vmatpush1.msra.mxu0 0.0
    %690 = vmatprep.subr.mxu0 0.0
    %691 = vmatpush1.msra.mxu0 0.0
    %692 = vmatprep.subr.mxu0 0.0
    %693 = vmatpush1.msra.mxu0 0.0
    %694 = vmatprep.subr.mxu0 0.0
    %695 = vmatpush1.msra.mxu0 0.0
    %696 = vmatprep.subr.mxu0 0.0
    %697 = vmatpush1.msra.mxu0 0.0
    %698 = vmatprep.subr.mxu0 0.0
    %699 = vmatpush1.msra.mxu0 0.0
    %700 = vmatprep.subr.mxu0 0.0
    %701 = vmatpush1.msra.mxu0 0.0
    %702 = vmatprep.subr.mxu0 0.0
    %703 = vmatpush1.msra.mxu0 0.0
    %704 = vmatprep.subr.mxu0 0.0
    %705 = vmatpush1.msra.mxu0 0.0
    %706 = vmatprep.mubr.f32.mxu0 0.0
    %707 = vmatmul.mubr.f32.gmra.mrb[0].mxu0 %v640
    %v708 = vpop.f32.mrb[0].mxu0
    %v709 = vadd.f32 0.0, %v708
    %v710 = vpop.f32.mrb[0].mxu0
    %v711 = vadd.f32 0.0, %v710
    %712 = vdwg.mxu0
    %v713 = vadd.f32 %v182, %v709
    %v714 = vadd.f32 %v184, %v711
    %v715 = vxor.u32 %v713, 2147483648
    %v716 = vmul.f32 %v715, 1.442695
    %v717 = vpow.pop %v716
    %v718 = vadd.f32 %v717, 1.0
    %v719 = vrcp.pop %v718
    %v720 = vmul.f32 1.0, %v719
    %v721 = vtanh.pop %v714
    %v722 = vxor.u32 %v714, 2147483648
    %v723 = vmul.f32 %v722, 1.442695
    %v724 = vpow.pop %v723
    %v725 = vadd.f32 %v724, 1.0
    %v726 = vrcp.pop %v725
    %v727 = vmul.f32 1.0, %v726
    %v729 = vrot.slane %v633, 6
    %v731 = vmul.f32 %v720, %v729
    %v732 = vmul.f32 %v720, %v721
    %734 = vrot.lane.b32.xlu0 %v732, 64
    %v735 = vpop.permute.xlu0 %734
    %v737 = vadd.f32 %v731, %v735
    %v738 = vtanh.pop %v737
    %v739 = vmul.f32 %v727, %v738
    %741 = vrot.lane.b32.xlu0 %v739, 64
    %v742 = vpop.permute.xlu0 %741
    %v743 = vsel %vm204, %v742, 0
    %745 = vmatprep.subr.mxu0 %v187
    %746 = vmatpush1.msra.mxu0 %v186
    %747 = vmatprep.subr.mxu0 %v189
    %748 = vmatpush1.msra.mxu0 %v188
    %749 = vmatprep.subr.mxu0 %v191
    %750 = vmatpush1.msra.mxu0 %v190
    %751 = vmatprep.subr.mxu0 %v193
    %752 = vmatpush1.msra.mxu0 %v192
    %753 = vmatprep.subr.mxu0 %v195
    %754 = vmatpush1.msra.mxu0 %v194
    %755 = vmatprep.subr.mxu0 %v197
    %756 = vmatpush1.msra.mxu0 %v196
    %757 = vmatprep.subr.mxu0 %v199
    %758 = vmatpush1.msra.mxu0 %v198
    %759 = vmatprep.subr.mxu0 %v201
    %760 = vmatpush1.msra.mxu0 %v200
    %761 = vmatprep.subr.mxu0 0.0
    %762 = vmatpush1.msra.mxu0 0.0
    %763 = vmatprep.subr.mxu0 0.0
    %764 = vmatpush1.msra.mxu0 0.0
    %765 = vmatprep.subr.mxu0 0.0
    %766 = vmatpush1.msra.mxu0 0.0
    %767 = vmatprep.subr.mxu0 0.0
    %768 = vmatpush1.msra.mxu0 0.0
    %769 = vmatprep.subr.mxu0 0.0
    %770 = vmatpush1.msra.mxu0 0.0
    %771 = vmatprep.subr.mxu0 0.0
    %772 = vmatpush1.msra.mxu0 0.0
    %773 = vmatprep.subr.mxu0 0.0
    %774 = vmatpush1.msra.mxu0 0.0
    %775 = vmatprep.subr.mxu0 0.0
    %776 = vmatpush1.msra.mxu0 0.0
    %777 = vmatprep.subr.mxu0 0.0
    %778 = vmatpush1.msra.mxu0 0.0
    %779 = vmatprep.subr.mxu0 0.0
    %780 = vmatpush1.msra.mxu0 0.0
    %781 = vmatprep.subr.mxu0 0.0
    %782 = vmatpush1.msra.mxu0 0.0
    %783 = vmatprep.subr.mxu0 0.0
    %784 = vmatpush1.msra.mxu0 0.0
    %785 = vmatprep.subr.mxu0 0.0
    %786 = vmatpush1.msra.mxu0 0.0
    %787 = vmatprep.subr.mxu0 0.0
    %788 = vmatpush1.msra.mxu0 0.0
    %789 = vmatprep.subr.mxu0 0.0
    %790 = vmatpush1.msra.mxu0 0.0
    %791 = vmatprep.subr.mxu0 0.0
    %792 = vmatpush1.msra.mxu0 0.0
    %793 = vmatprep.subr.mxu0 0.0
    %794 = vmatpush1.msra.mxu0 0.0
    %795 = vmatprep.subr.mxu0 0.0
    %796 = vmatpush1.msra.mxu0 0.0
    %797 = vmatprep.subr.mxu0 0.0
    %798 = vmatpush1.msra.mxu0 0.0
    %799 = vmatprep.subr.mxu0 0.0
    %800 = vmatpush1.msra.mxu0 0.0
    %801 = vmatprep.subr.mxu0 0.0
    %802 = vmatpush1.msra.mxu0 0.0
    %803 = vmatprep.subr.mxu0 0.0
    %804 = vmatpush1.msra.mxu0 0.0
    %805 = vmatprep.subr.mxu0 0.0
    %806 = vmatpush1.msra.mxu0 0.0
    %807 = vmatprep.subr.mxu0 0.0
    %808 = vmatpush1.msra.mxu0 0.0
    %809 = vmatprep.mubr.f32.mxu0 0.0
    %810 = vmatmul.mubr.f32.gmra.mrb[0].mxu0 %v743
    %v811 = vpop.f32.mrb[0].mxu0
    %v812 = vadd.f32 0.0, %v811
    %v813 = vpop.f32.mrb[0].mxu0
    %v814 = vadd.f32 0.0, %v813
    %815 = vdwg.mxu0
    %v818 = vrot.slane %v812, 6
    %v819 = vrot.slane %v814, 6
    %v822 = vadd.f32 %v182, %v818
    %v823 = vadd.f32 %v184, %v819
    %v824 = vxor.u32 %v822, 2147483648
    %v825 = vmul.f32 %v824, 1.442695
    %v826 = vpow.pop %v825
    %v827 = vadd.f32 %v826, 1.0
    %v828 = vrcp.pop %v827
    %v829 = vmul.f32 1.0, %v828
    %v830 = vtanh.pop %v823
    %v831 = vxor.u32 %v823, 2147483648
    %v832 = vmul.f32 %v831, 1.442695
    %v833 = vpow.pop %v832
    %v834 = vadd.f32 %v833, 1.0
    %v835 = vrcp.pop %v834
    %v836 = vmul.f32 1.0, %v835
    %v838 = vrot.slane %v737, 6
    %v840 = vmul.f32 %v829, %v838
    %v841 = vmul.f32 %v829, %v830
    %843 = vrot.lane.b32.xlu0 %v841, 64
    %v844 = vpop.permute.xlu0 %843
    %v846 = vadd.f32 %v840, %v844
    %v847 = vtanh.pop %v846
    %v848 = vmul.f32 %v836, %v847
    %v850 = vrot.slane %v848, 2
    %851 = vrot.lane.b32.xlu0 %v850, 64
    %v852 = vpop.permute.xlu0 %851
    %v853 = vsel %vm204, %v852, 0
    %855 = vmatprep.subr.mxu0 %v187
    %856 = vmatpush1.msra.mxu0 %v186
    %857 = vmatprep.subr.mxu0 %v189
    %858 = vmatpush1.msra.mxu0 %v188
    %859 = vmatprep.subr.mxu0 %v191
    %860 = vmatpush1.msra.mxu0 %v190
    %861 = vmatprep.subr.mxu0 %v193
    %862 = vmatpush1.msra.mxu0 %v192
    %863 = vmatprep.subr.mxu0 %v195
    %864 = vmatpush1.msra.mxu0 %v194
    %865 = vmatprep.subr.mxu0 %v197
    %866 = vmatpush1.msra.mxu0 %v196
    %867 = vmatprep.subr.mxu0 %v199
    %868 = vmatpush1.msra.mxu0 %v198
    %869 = vmatprep.subr.mxu0 %v201
    %870 = vmatpush1.msra.mxu0 %v200
    %871 = vmatprep.subr.mxu0 0.0
    %872 = vmatpush1.msra.mxu0 0.0
    %873 = vmatprep.subr.mxu0 0.0
    %874 = vmatpush1.msra.mxu0 0.0
    %875 = vmatprep.subr.mxu0 0.0
    %876 = vmatpush1.msra.mxu0 0.0
    %877 = vmatprep.subr.mxu0 0.0
    %878 = vmatpush1.msra.mxu0 0.0
    %879 = vmatprep.subr.mxu0 0.0
    %880 = vmatpush1.msra.mxu0 0.0
    %881 = vmatprep.subr.mxu0 0.0
    %882 = vmatpush1.msra.mxu0 0.0
    %883 = vmatprep.subr.mxu0 0.0
    %884 = vmatpush1.msra.mxu0 0.0
    %885 = vmatprep.subr.mxu0 0.0
    %886 = vmatpush1.msra.mxu0 0.0
    %887 = vmatprep.subr.mxu0 0.0
    %888 = vmatpush1.msra.mxu0 0.0
    %889 = vmatprep.subr.mxu0 0.0
    %890 = vmatpush1.msra.mxu0 0.0
    %891 = vmatprep.subr.mxu0 0.0
    %892 = vmatpush1.msra.mxu0 0.0
    %893 = vmatprep.subr.mxu0 0.0
    %894 = vmatpush1.msra.mxu0 0.0
    %895 = vmatprep.subr.mxu0 0.0
    %896 = vmatpush1.msra.mxu0 0.0
    %897 = vmatprep.subr.mxu0 0.0
    %898 = vmatpush1.msra.mxu0 0.0
    %899 = vmatprep.subr.mxu0 0.0
    %900 = vmatpush1.msra.mxu0 0.0
    %901 = vmatprep.subr.mxu0 0.0
    %902 = vmatpush1.msra.mxu0 0.0
    %903 = vmatprep.subr.mxu0 0.0
    %904 = vmatpush1.msra.mxu0 0.0
    %905 = vmatprep.subr.mxu0 0.0
    %906 = vmatpush1.msra.mxu0 0.0
    %907 = vmatprep.subr.mxu0 0.0
    %908 = vmatpush1.msra.mxu0 0.0
    %909 = vmatprep.subr.mxu0 0.0
    %910 = vmatpush1.msra.mxu0 0.0
    %911 = vmatprep.subr.mxu0 0.0
    %912 = vmatpush1.msra.mxu0 0.0
    %913 = vmatprep.subr.mxu0 0.0
    %914 = vmatpush1.msra.mxu0 0.0
    %915 = vmatprep.subr.mxu0 0.0
    %916 = vmatpush1.msra.mxu0 0.0
    %917 = vmatprep.subr.mxu0 0.0
    %918 = vmatpush1.msra.mxu0 0.0
    %919 = vmatprep.mubr.f32.mxu0 0.0
    %920 = vmatmul.mubr.f32.gmra.mrb[0].mxu0 %v853
    %v921 = vpop.f32.mrb[0].mxu0
    %v922 = vadd.f32 0.0, %v921
    %v923 = vpop.f32.mrb[0].mxu0
    %v924 = vadd.f32 0.0, %v923
    %925 = vdwg.mxu0
    %v928 = vrot.slane %v922, 4
    %v929 = vrot.slane %v924, 4
    %v932 = vadd.f32 %v182, %v928
    %v933 = vadd.f32 %v184, %v929
    %v934 = vxor.u32 %v932, 2147483648
    %v935 = vmul.f32 %v934, 1.442695
    %v936 = vpow.pop %v935
    %v937 = vadd.f32 %v936, 1.0
    %v938 = vrcp.pop %v937
    %v939 = vmul.f32 1.0, %v938
    %v940 = vtanh.pop %v933
    %v941 = vxor.u32 %v933, 2147483648
    %v942 = vmul.f32 %v941, 1.442695
    %v943 = vpow.pop %v942
    %v944 = vadd.f32 %v943, 1.0
    %v945 = vrcp.pop %v944
    %v946 = vmul.f32 1.0, %v945
    %v948 = vrot.slane %v846, 6
    %v950 = vmul.f32 %v939, %v948
    %v951 = vmul.f32 %v939, %v940
    %953 = vrot.lane.b32.xlu0 %v951, 64
    %v954 = vpop.permute.xlu0 %953
    %v956 = vadd.f32 %v950, %v954
    %v957 = vtanh.pop %v956
    %v958 = vmul.f32 %v946, %v957
    %v960 = vrot.slane %v958, 4
    %961 = vrot.lane.b32.xlu0 %v960, 64
    %v962 = vpop.permute.xlu0 %961
    %v963 = vsel %vm204, %v962, 0
    %965 = vmatprep.subr.mxu0 %v187
    %966 = vmatpush1.msra.mxu0 %v186
    %967 = vmatprep.subr.mxu0 %v189
    %968 = vmatpush1.msra.mxu0 %v188
    %969 = vmatprep.subr.mxu0 %v191
    %970 = vmatpush1.msra.mxu0 %v190
    %971 = vmatprep.subr.mxu0 %v193
    %972 = vmatpush1.msra.mxu0 %v192
    %973 = vmatprep.subr.mxu0 %v195
    %974 = vmatpush1.msra.mxu0 %v194
    %975 = vmatprep.subr.mxu0 %v197
    %976 = vmatpush1.msra.mxu0 %v196
    %977 = vmatprep.subr.mxu0 %v199
    %978 = vmatpush1.msra.mxu0 %v198
    %979 = vmatprep.subr.mxu0 %v201
    %980 = vmatpush1.msra.mxu0 %v200
    %981 = vmatprep.subr.mxu0 0.0
    %982 = vmatpush1.msra.mxu0 0.0
    %983 = vmatprep.subr.mxu0 0.0
    %984 = vmatpush1.msra.mxu0 0.0
    %985 = vmatprep.subr.mxu0 0.0
    %986 = vmatpush1.msra.mxu0 0.0
    %987 = vmatprep.subr.mxu0 0.0
    %988 = vmatpush1.msra.mxu0 0.0
    %989 = vmatprep.subr.mxu0 0.0
    %990 = vmatpush1.msra.mxu0 0.0
    %991 = vmatprep.subr.mxu0 0.0
    %992 = vmatpush1.msra.mxu0 0.0
    %993 = vmatprep.subr.mxu0 0.0
    %994 = vmatpush1.msra.mxu0 0.0
    %995 = vmatprep.subr.mxu0 0.0
    %996 = vmatpush1.msra.mxu0 0.0
    %997 = vmatprep.subr.mxu0 0.0
    %998 = vmatpush1.msra.mxu0 0.0
    %999 = vmatprep.subr.mxu0 0.0
    %1000 = vmatpush1.msra.mxu0 0.0
    %1001 = vmatprep.subr.mxu0 0.0
    %1002 = vmatpush1.msra.mxu0 0.0
    %1003 = vmatprep.subr.mxu0 0.0
    %1004 = vmatpush1.msra.mxu0 0.0
    %1005 = vmatprep.subr.mxu0 0.0
    %1006 = vmatpush1.msra.mxu0 0.0
    %1007 = vmatprep.subr.mxu0 0.0
    %1008 = vmatpush1.msra.mxu0 0.0
    %1009 = vmatprep.subr.mxu0 0.0
    %1010 = vmatpush1.msra.mxu0 0.0
    %1011 = vmatprep.subr.mxu0 0.0
    %1012 = vmatpush1.msra.mxu0 0.0
    %1013 = vmatprep.subr.mxu0 0.0
    %1014 = vmatpush1.msra.mxu0 0.0
    %1015 = vmatprep.subr.mxu0 0.0
    %1016 = vmatpush1.msra.mxu0 0.0
    %1017 = vmatprep.subr.mxu0 0.0
    %1018 = vmatpush1.msra.mxu0 0.0
    %1019 = vmatprep.subr.mxu0 0.0
    %1020 = vmatpush1.msra.mxu0 0.0
    %1021 = vmatprep.subr.mxu0 0.0
    %1022 = vmatpush1.msra.mxu0 0.0
    %1023 = vmatprep.subr.mxu0 0.0
    %1024 = vmatpush1.msra.mxu0 0.0
    %1025 = vmatprep.subr.mxu0 0.0
    %1026 = vmatpush1.msra.mxu0 0.0
    %1027 = vmatprep.subr.mxu0 0.0
    %1028 = vmatpush1.msra.mxu0 0.0
    %1029 = vmatprep.mubr.f32.mxu0 0.0
    %1030 = vmatmul.mubr.f32.gmra.mrb[0].mxu0 %v963
    %v1031 = vpop.f32.mrb[0].mxu0
    %v1032 = vadd.f32 0.0, %v1031
    %v1033 = vpop.f32.mrb[0].mxu0
    %v1034 = vadd.f32 0.0, %v1033
    %1035 = vdwg.mxu0
    %v1038 = vrot.slane %v1032, 2
    %v1039 = vrot.slane %v1034, 2
    %v1042 = vadd.f32 %v182, %v1038
    %v1043 = vadd.f32 %v184, %v1039
    %v1044 = vxor.u32 %v1042, 2147483648
    %v1045 = vmul.f32 %v1044, 1.442695
    %v1046 = vpow.pop %v1045
    %v1047 = vadd.f32 %v1046, 1.0
    %v1048 = vrcp.pop %v1047
    %v1049 = vmul.f32 1.0, %v1048
    %v1050 = vtanh.pop %v1043
    %v1051 = vxor.u32 %v1043, 2147483648
    %v1052 = vmul.f32 %v1051, 1.442695
    %v1053 = vpow.pop %v1052
    %v1054 = vadd.f32 %v1053, 1.0
    %v1055 = vrcp.pop %v1054
    %v1056 = vmul.f32 1.0, %v1055
    %v1058 = vrot.slane %v956, 6
    %v1060 = vmul.f32 %v1049, %v1058
    %v1061 = vmul.f32 %v1049, %v1050
    %1063 = vrot.lane.b32.xlu0 %v1061, 64
    %v1064 = vpop.permute.xlu0 %1063
    %v1066 = vadd.f32 %v1060, %v1064
    %v1067 = vtanh.pop %v1066
    %v1068 = vmul.f32 %v1056, %v1067
    %vm1070 = vcmask 517120
    %1071 = vst.msk [vmem:[#allocation2] sm:$0x3] %vm1070, %v309
    %vm1072 = vcmask 1041920
    %1073 = vst.msk [vmem:[#allocation2 + $0xe] sm:$0x3] %vm1072, %v306
    %1074 = vrot.lane.b32.xlu0 %v415, 64
    %v1075 = vpop.permute.xlu0 %1074
    %vm1077 = vcmask 519170
    %1078 = vst.msk [vmem:[#allocation2] sm:$0xc] %vm1077, %v1075
    %vm1079 = vcmask 1043970
    %1080 = vst.msk [vmem:[#allocation2 + $0xa] sm:$0xc] %vm1079, %v415
    %1081 = vrot.lane.b32.xlu0 %v525, 64
    %v1082 = vpop.permute.xlu0 %1081
    %vm1084 = vcmask 521220
    %1085 = vst.msk [vmem:[#allocation2] sm:$0x30] %vm1084, %v1082
    %vm1086 = vcmask 1046020
    %1087 = vst.msk [vmem:[#allocation2 + $0x6] sm:$0x30] %vm1086, %v525
    %1088 = vrot.lane.b32.xlu0 %v635, 64
    %v1089 = vpop.permute.xlu0 %1088
    %vm1091 = vcmask 523270
    %1092 = vst.msk [vmem:[#allocation2] sm:$0xc0] %vm1091, %v1089
    %vm1093 = vcmask 1048070
    %1094 = vst.msk [vmem:[#allocation2 + $0x2] sm:$0xc0] %vm1093, %v635
    %1096 = vst.msk [vmem:[#allocation2 + $0x8] sm:$0x3] %vm1070, %v742
    %1097 = vst.msk [vmem:[#allocation2 + $0x6] sm:$0x3] %vm1072, %v739
    %1098 = vrot.lane.b32.xlu0 %v848, 64
    %v1099 = vpop.permute.xlu0 %1098
    %1101 = vst.msk [vmem:[#allocation2 + $0x8] sm:$0xc] %vm1077, %v1099
    %1102 = vst.msk [vmem:[#allocation2 + $0x2] sm:$0xc] %vm1079, %v848
    %1103 = vrot.lane.b32.xlu0 %v958, 64
    %v1104 = vpop.permute.xlu0 %1103
    %1106 = vst.msk [vmem:[#allocation2 + $0x8] sm:$0x30] %vm1084, %v1104
    %1107 = vst.msk [vmem:[#allocation2 - $0x2] sm:$0x30] %vm1086, %v958
    %1109 = vrot.lane.b32.xlu0 %v1068, 64
    %v1110 = vpop.permute.xlu0 %1109
    %1112 = vst.msk [vmem:[#allocation2 + $0x8] sm:$0xc0] %vm1091, %v1110
    %1113 = vst.msk [vmem:[#allocation2 - $0x6] sm:$0xc0] %vm1093, %v1068
    %v1114 = vld [vmem:[#allocation2] sm:$0xff]
    %v1115 = vld [vmem:[#allocation2 + $0x8] sm:$0xff]
    %v1116 = vld [vmem:[%s6] sm:$0xff]
    %v1117 = vld [vmem:[%s6 + $0x8] sm:$0xff]
    %v1118 = vld [vmem:[%s6 + $0x10] sm:$0xff]
    %v1119 = vld [vmem:[%s6 + $0x18] sm:$0xff]
    %v1120 = vld [vmem:[%s6 + $0x20] sm:$0xff]
    %v1121 = vld [vmem:[%s6 + $0x28] sm:$0xff]
    %v1122 = vld [vmem:[%s6 + $0x30] sm:$0xff]
    %v1123 = vld [vmem:[%s6 + $0x38] sm:$0xff]
    %v1124 = vld [vmem:[%s6 + $0x40] sm:$0xff]
    %v1125 = vld [vmem:[%s6 + $0x48] sm:$0xff]
    %v1126 = vld [vmem:[%s6 + $0x50] sm:$0xff]
    %v1127 = vld [vmem:[%s6 + $0x58] sm:$0xff]
    %v1128 = vld [vmem:[%s6 + $0x60] sm:$0xff]
    %v1129 = vld [vmem:[%s6 + $0x68] sm:$0xff]
    %v1130 = vld [vmem:[%s6 + $0x70] sm:$0xff]
    %v1131 = vld [vmem:[%s6 + $0x78] sm:$0xff]
    %v1132 = vld [vmem:[%s6 + $0x80] sm:$0xff]
    %v1133 = vld [vmem:[%s6 + $0x88] sm:$0xff]
    %v1134 = vld [vmem:[%s6 + $0x90] sm:$0xff]
    %v1135 = vld [vmem:[%s6 + $0x98] sm:$0xff]
    %v1136 = vld [vmem:[%s6 + $0xa0] sm:$0xff]
    %v1137 = vld [vmem:[%s6 + $0xa8] sm:$0xff]
    %v1138 = vld [vmem:[%s6 + $0xb0] sm:$0xff]
    %v1139 = vld [vmem:[%s6 + $0xb8] sm:$0xff]
    %v1140 = vld [vmem:[%s6 + $0xc0] sm:$0xff]
    %v1141 = vld [vmem:[%s6 + $0xc8] sm:$0xff]
    %v1142 = vld [vmem:[%s6 + $0xd0] sm:$0xff]
    %v1143 = vld [vmem:[%s6 + $0xd8] sm:$0xff]
    %v1144 = vld [vmem:[%s6 + $0xe0] sm:$0xff]
    %v1145 = vld [vmem:[%s6 + $0xe8] sm:$0xff]
    %v1146 = vld [vmem:[%s6 + $0xf0] sm:$0xff]
    %v1147 = vld [vmem:[%s6 + $0xf8] sm:$0xff]
    %v1148 = vld [vmem:[%s8] sm:$0x3]
    %v1150 = vlaneseq
    %v1151 = vshrl.u32 %v1150, 7
    %v1152 = vsub.s32 0, %v1151
    %v1153 = vrot.slane %v1148, %v1152
    %v1154 = vlaneseq
    %v1155 = vshrl.u32 %v1154, 7
    %v1156 = vsub.s32 1, %v1155
    %v1157 = vrot.slane %v1148, %v1156
    %1160 = vmatprep.subr.mxu0 %v1117
    %1161 = vmatpush1.msra.mxu0 %v1116
    %1162 = vmatprep.subr.mxu0 %v1119
    %1163 = vmatpush1.msra.mxu0 %v1118
    %1164 = vmatprep.subr.mxu0 %v1121
    %1165 = vmatpush1.msra.mxu0 %v1120
    %1166 = vmatprep.subr.mxu0 %v1123
    %1167 = vmatpush1.msra.mxu0 %v1122
    %1168 = vmatprep.subr.mxu0 %v1125
    %1169 = vmatpush1.msra.mxu0 %v1124
    %1170 = vmatprep.subr.mxu0 %v1127
    %1171 = vmatpush1.msra.mxu0 %v1126
    %1172 = vmatprep.subr.mxu0 %v1129
    %1173 = vmatpush1.msra.mxu0 %v1128
    %1174 = vmatprep.subr.mxu0 %v1131
    %1175 = vmatpush1.msra.mxu0 %v1130
    %1176 = vmatprep.subr.mxu0 %v1133
    %1177 = vmatpush1.msra.mxu0 %v1132
    %1178 = vmatprep.subr.mxu0 %v1135
    %1179 = vmatpush1.msra.mxu0 %v1134
    %1180 = vmatprep.subr.mxu0 %v1137
    %1181 = vmatpush1.msra.mxu0 %v1136
    %1182 = vmatprep.subr.mxu0 %v1139
    %1183 = vmatpush1.msra.mxu0 %v1138
    %1184 = vmatprep.subr.mxu0 %v1141
    %1185 = vmatpush1.msra.mxu0 %v1140
    %1186 = vmatprep.subr.mxu0 %v1143
    %1187 = vmatpush1.msra.mxu0 %v1142
    %1188 = vmatprep.subr.mxu0 %v1145
    %1189 = vmatpush1.msra.mxu0 %v1144
    %1190 = vmatprep.subr.mxu0 %v1147
    %1191 = vmatpush1.msra.mxu0 %v1146
    %1192 = vmatprep.subr.mxu0 0.0
    %1193 = vmatpush1.msra.mxu0 0.0
    %1194 = vmatprep.subr.mxu0 0.0
    %1195 = vmatpush1.msra.mxu0 0.0
    %1196 = vmatprep.subr.mxu0 0.0
    %1197 = vmatpush1.msra.mxu0 0.0
    %1198 = vmatprep.subr.mxu0 0.0
    %1199 = vmatpush1.msra.mxu0 0.0
    %1200 = vmatprep.subr.mxu0 0.0
    %1201 = vmatpush1.msra.mxu0 0.0
    %1202 = vmatprep.subr.mxu0 0.0
    %1203 = vmatpush1.msra.mxu0 0.0
    %1204 = vmatprep.subr.mxu0 0.0
    %1205 = vmatpush1.msra.mxu0 0.0
    %1206 = vmatprep.subr.mxu0 0.0
    %1207 = vmatpush1.msra.mxu0 0.0
    %1208 = vmatprep.subr.mxu0 0.0
    %1209 = vmatpush1.msra.mxu0 0.0
    %1210 = vmatprep.subr.mxu0 0.0
    %1211 = vmatpush1.msra.mxu0 0.0
    %1212 = vmatprep.subr.mxu0 0.0
    %1213 = vmatpush1.msra.mxu0 0.0
    %1214 = vmatprep.subr.mxu0 0.0
    %1215 = vmatpush1.msra.mxu0 0.0
    %1216 = vmatprep.subr.mxu0 0.0
    %1217 = vmatpush1.msra.mxu0 0.0
    %1218 = vmatprep.subr.mxu0 0.0
    %1219 = vmatpush1.msra.mxu0 0.0
    %1220 = vmatprep.subr.mxu0 0.0
    %1221 = vmatpush1.msra.mxu0 0.0
    %1222 = vmatprep.subr.mxu0 0.0
    %1223 = vmatpush1.msra.mxu0 0.0
    %1224 = vmatprep.mubr.f32.mxu0 0.0
    %1225 = vmatmul.mubr.f32.gmra.mrb[0].mxu0 %v1114
    %v1226 = vpop.f32.mrb[0].mxu0
    %v1227 = vadd.f32 %v1153, %v1226
    %v1228 = vpop.f32.mrb[0].mxu0
    %v1229 = vadd.f32 %v1157, %v1228
    %1230 = vmatprep.mubr.f32.mxu0 0.0
    %1231 = vmatmul.mubr.f32.gmra.mrb[0].mxu0 %v1115
    %v1232 = vpop.f32.mrb[0].mxu0
    %v1233 = vadd.f32 %v1153, %v1232
    %v1234 = vpop.f32.mrb[0].mxu0
    %v1235 = vadd.f32 %v1157, %v1234
    %1236 = vdwg.mxu0
    %v1237 = vld [vmem:[#allocation8] sm:$0xff]
    %v1238 = vld [vmem:[#allocation8 + $0x8] sm:$0xff]
    %v1239 = vld [vmem:[#allocation8 + $0x10] sm:$0xff]
    %v1240 = vld [vmem:[#allocation8 + $0x18] sm:$0xff]
    %v1241 = vld [vmem:[#allocation8 + $0x20] sm:$0xff]
    %v1242 = vld [vmem:[#allocation8 + $0x28] sm:$0xff]
    %v1243 = vld [vmem:[#allocation8 + $0x30] sm:$0xff]
    %v1244 = vld [vmem:[#allocation8 + $0x38] sm:$0xff]
    %v1245 = vld [vmem:[#allocation8 + $0x40] sm:$0xff]
    %v1246 = vld [vmem:[#allocation8 + $0x48] sm:$0xff]
    %v1247 = vld [vmem:[#allocation8 + $0x50] sm:$0xff]
    %v1248 = vld [vmem:[#allocation8 + $0x58] sm:$0xff]
    %v1249 = vld [vmem:[#allocation8 + $0x60] sm:$0xff]
    %v1250 = vld [vmem:[#allocation8 + $0x68] sm:$0xff]
    %v1251 = vld [vmem:[#allocation8 + $0x70] sm:$0xff]
    %v1252 = vld [vmem:[#allocation8 + $0x78] sm:$0xff]
    %s1253 = scalar_lea.vmem %s1, 2
    %v1254 = vld [vmem:[%s1253] sm:$0x3]
    %s1255 = scalar_lea.vmem %s2, 2
    %v1256 = vld [vmem:[%s1255] sm:$0x3]
    %v1258 = vsel %vm204, %v1254, 0
    %1260 = vmatprep.subr.mxu0 %v1238
    %1261 = vmatpush1.msra.mxu0 %v1237
    %1262 = vmatprep.subr.mxu0 %v1240
    %1263 = vmatpush1.msra.mxu0 %v1239
    %1264 = vmatprep.subr.mxu0 %v1242
    %1265 = vmatpush1.msra.mxu0 %v1241
    %1266 = vmatprep.subr.mxu0 %v1244
    %1267 = vmatpush1.msra.mxu0 %v1243
    %1268 = vmatprep.subr.mxu0 %v1246
    %1269 = vmatpush1.msra.mxu0 %v1245
    %1270 = vmatprep.subr.mxu0 %v1248
    %1271 = vmatpush1.msra.mxu0 %v1247
    %1272 = vmatprep.subr.mxu0 %v1250
    %1273 = vmatpush1.msra.mxu0 %v1249
    %1274 = vmatprep.subr.mxu0 %v1252
    %1275 = vmatpush1.msra.mxu0 %v1251
    %1276 = vmatprep.subr.mxu0 0.0
    %1277 = vmatpush1.msra.mxu0 0.0
    %1278 = vmatprep.subr.mxu0 0.0
    %1279 = vmatpush1.msra.mxu0 0.0
    %1280 = vmatprep.subr.mxu0 0.0
    %1281 = vmatpush1.msra.mxu0 0.0
    %1282 = vmatprep.subr.mxu0 0.0
    %1283 = vmatpush1.msra.mxu0 0.0
    %1284 = vmatprep.subr.mxu0 0.0
    %1285 = vmatpush1.msra.mxu0 0.0
    %1286 = vmatprep.subr.mxu0 0.0
    %1287 = vmatpush1.msra.mxu0 0.0
    %1288 = vmatprep.subr.mxu0 0.0
    %1289 = vmatpush1.msra.mxu0 0.0
    %1290 = vmatprep.subr.mxu0 0.0
    %1291 = vmatpush1.msra.mxu0 0.0
    %1292 = vmatprep.subr.mxu0 0.0
    %1293 = vmatpush1.msra.mxu0 0.0
    %1294 = vmatprep.subr.mxu0 0.0
    %1295 = vmatpush1.msra.mxu0 0.0
    %1296 = vmatprep.subr.mxu0 0.0
    %1297 = vmatpush1.msra.mxu0 0.0
    %1298 = vmatprep.subr.mxu0 0.0
    %1299 = vmatpush1.msra.mxu0 0.0
    %1300 = vmatprep.subr.mxu0 0.0
    %1301 = vmatpush1.msra.mxu0 0.0
    %1302 = vmatprep.subr.mxu0 0.0
    %1303 = vmatpush1.msra.mxu0 0.0
    %1304 = vmatprep.subr.mxu0 0.0
    %1305 = vmatpush1.msra.mxu0 0.0
    %1306 = vmatprep.subr.mxu0 0.0
    %1307 = vmatpush1.msra.mxu0 0.0
    %1308 = vmatprep.subr.mxu0 0.0
    %1309 = vmatpush1.msra.mxu0 0.0
    %1310 = vmatprep.subr.mxu0 0.0
    %1311 = vmatpush1.msra.mxu0 0.0
    %1312 = vmatprep.subr.mxu0 0.0
    %1313 = vmatpush1.msra.mxu0 0.0
    %1314 = vmatprep.subr.mxu0 0.0
    %1315 = vmatpush1.msra.mxu0 0.0
    %1316 = vmatprep.subr.mxu0 0.0
    %1317 = vmatpush1.msra.mxu0 0.0
    %1318 = vmatprep.subr.mxu0 0.0
    %1319 = vmatpush1.msra.mxu0 0.0
    %1320 = vmatprep.subr.mxu0 0.0
    %1321 = vmatpush1.msra.mxu0 0.0
    %1322 = vmatprep.subr.mxu0 0.0
    %1323 = vmatpush1.msra.mxu0 0.0
    %1324 = vmatprep.mubr.f32.mxu0 0.0
    %1325 = vmatmul.mubr.f32.gmra.mrb[0].mxu0 %v1258
    %v1326 = vpop.f32.mrb[0].mxu0
    %v1327 = vadd.f32 0.0, %v1326
    %v1328 = vpop.f32.mrb[0].mxu0
    %v1329 = vadd.f32 0.0, %v1328
    %1330 = vdwg.mxu0
    %v1331 = vadd.f32 %v1227, %v1327
    %v1332 = vadd.f32 %v1229, %v1329
    %v1333 = vxor.u32 %v1331, 2147483648
    %v1334 = vmul.f32 %v1333, 1.442695
    %v1335 = vpow.pop %v1334
    %v1336 = vadd.f32 %v1335, 1.0
    %v1337 = vrcp.pop %v1336
    %v1338 = vmul.f32 1.0, %v1337
    %v1339 = vtanh.pop %v1332
    %v1340 = vxor.u32 %v1332, 2147483648
    %v1341 = vmul.f32 %v1340, 1.442695
    %v1342 = vpow.pop %v1341
    %v1343 = vadd.f32 %v1342, 1.0
    %v1344 = vrcp.pop %v1343
    %v1345 = vmul.f32 1.0, %v1344
    %1347 = vrot.lane.b32.xlu0 %v1256, 64
    %v1348 = vpop.permute.xlu0 %1347
    %v1350 = vmul.f32 %v1338, %v1348
    %v1351 = vmul.f32 %v1338, %v1339
    %1353 = vrot.lane.b32.xlu0 %v1351, 64
    %v1354 = vpop.permute.xlu0 %1353
    %v1356 = vadd.f32 %v1350, %v1354
    %v1357 = vtanh.pop %v1356
    %v1358 = vmul.f32 %v1345, %v1357
    %1360 = vrot.lane.b32.xlu0 %v1358, 64
    %v1361 = vpop.permute.xlu0 %1360
    %v1362 = vsel %vm204, %v1361, 0
    %1364 = vmatprep.subr.mxu0 %v1238
    %1365 = vmatpush1.msra.mxu0 %v1237
    %1366 = vmatprep.subr.mxu0 %v1240
    %1367 = vmatpush1.msra.mxu0 %v1239
    %1368 = vmatprep.subr.mxu0 %v1242
    %1369 = vmatpush1.msra.mxu0 %v1241
    %1370 = vmatprep.subr.mxu0 %v1244
    %1371 = vmatpush1.msra.mxu0 %v1243
    %1372 = vmatprep.subr.mxu0 %v1246
    %1373 = vmatpush1.msra.mxu0 %v1245
    %1374 = vmatprep.subr.mxu0 %v1248
    %1375 = vmatpush1.msra.mxu0 %v1247
    %1376 = vmatprep.subr.mxu0 %v1250
    %1377 = vmatpush1.msra.mxu0 %v1249
    %1378 = vmatprep.subr.mxu0 %v1252
    %1379 = vmatpush1.msra.mxu0 %v1251
    %1380 = vmatprep.subr.mxu0 0.0
    %1381 = vmatpush1.msra.mxu0 0.0
    %1382 = vmatprep.subr.mxu0 0.0
    %1383 = vmatpush1.msra.mxu0 0.0
    %1384 = vmatprep.subr.mxu0 0.0
    %1385 = vmatpush1.msra.mxu0 0.0
    %1386 = vmatprep.subr.mxu0 0.0
    %1387 = vmatpush1.msra.mxu0 0.0
    %1388 = vmatprep.subr.mxu0 0.0
    %1389 = vmatpush1.msra.mxu0 0.0
    %1390 = vmatprep.subr.mxu0 0.0
    %1391 = vmatpush1.msra.mxu0 0.0
    %1392 = vmatprep.subr.mxu0 0.0
    %1393 = vmatpush1.msra.mxu0 0.0
    %1394 = vmatprep.subr.mxu0 0.0
    %1395 = vmatpush1.msra.mxu0 0.0
    %1396 = vmatprep.subr.mxu0 0.0
    %1397 = vmatpush1.msra.mxu0 0.0
    %1398 = vmatprep.subr.mxu0 0.0
    %1399 = vmatpush1.msra.mxu0 0.0
    %1400 = vmatprep.subr.mxu0 0.0
    %1401 = vmatpush1.msra.mxu0 0.0
    %1402 = vmatprep.subr.mxu0 0.0
    %1403 = vmatpush1.msra.mxu0 0.0
    %1404 = vmatprep.subr.mxu0 0.0
    %1405 = vmatpush1.msra.mxu0 0.0
    %1406 = vmatprep.subr.mxu0 0.0
    %1407 = vmatpush1.msra.mxu0 0.0
    %1408 = vmatprep.subr.mxu0 0.0
    %1409 = vmatpush1.msra.mxu0 0.0
    %1410 = vmatprep.subr.mxu0 0.0
    %1411 = vmatpush1.msra.mxu0 0.0
    %1412 = vmatprep.subr.mxu0 0.0
    %1413 = vmatpush1.msra.mxu0 0.0
    %1414 = vmatprep.subr.mxu0 0.0
    %1415 = vmatpush1.msra.mxu0 0.0
    %1416 = vmatprep.subr.mxu0 0.0
    %1417 = vmatpush1.msra.mxu0 0.0
    %1418 = vmatprep.subr.mxu0 0.0
    %1419 = vmatpush1.msra.mxu0 0.0
    %1420 = vmatprep.subr.mxu0 0.0
    %1421 = vmatpush1.msra.mxu0 0.0
    %1422 = vmatprep.subr.mxu0 0.0
    %1423 = vmatpush1.msra.mxu0 0.0
    %1424 = vmatprep.subr.mxu0 0.0
    %1425 = vmatpush1.msra.mxu0 0.0
    %1426 = vmatprep.subr.mxu0 0.0
    %1427 = vmatpush1.msra.mxu0 0.0
    %1428 = vmatprep.mubr.f32.mxu0 0.0
    %1429 = vmatmul.mubr.f32.gmra.mrb[0].mxu0 %v1362
    %v1430 = vpop.f32.mrb[0].mxu0
    %v1431 = vadd.f32 0.0, %v1430
    %v1432 = vpop.f32.mrb[0].mxu0
    %v1433 = vadd.f32 0.0, %v1432
    %1434 = vdwg.mxu0
    %v1437 = vrot.slane %v1431, 6
    %v1438 = vrot.slane %v1433, 6
    %v1441 = vadd.f32 %v1227, %v1437
    %v1442 = vadd.f32 %v1229, %v1438
    %v1443 = vxor.u32 %v1441, 2147483648
    %v1444 = vmul.f32 %v1443, 1.442695
    %v1445 = vpow.pop %v1444
    %v1446 = vadd.f32 %v1445, 1.0
    %v1447 = vrcp.pop %v1446
    %v1448 = vmul.f32 1.0, %v1447
    %v1449 = vtanh.pop %v1442
    %v1450 = vxor.u32 %v1442, 2147483648
    %v1451 = vmul.f32 %v1450, 1.442695
    %v1452 = vpow.pop %v1451
    %v1453 = vadd.f32 %v1452, 1.0
    %v1454 = vrcp.pop %v1453
    %v1455 = vmul.f32 1.0, %v1454
    %v1457 = vrot.slane %v1356, 6
    %v1459 = vmul.f32 %v1448, %v1457
    %v1460 = vmul.f32 %v1448, %v1449
    %1462 = vrot.lane.b32.xlu0 %v1460, 64
    %v1463 = vpop.permute.xlu0 %1462
    %v1465 = vadd.f32 %v1459, %v1463
    %v1466 = vtanh.pop %v1465
    %v1467 = vmul.f32 %v1455, %v1466
    %v1469 = vrot.slane %v1467, 2
    %1470 = vrot.lane.b32.xlu0 %v1469, 64
    %v1471 = vpop.permute.xlu0 %1470
    %v1472 = vsel %vm204, %v1471, 0
    %1474 = vmatprep.subr.mxu0 %v1238
    %1475 = vmatpush1.msra.mxu0 %v1237
    %1476 = vmatprep.subr.mxu0 %v1240
    %1477 = vmatpush1.msra.mxu0 %v1239
    %1478 = vmatprep.subr.mxu0 %v1242
    %1479 = vmatpush1.msra.mxu0 %v1241
    %1480 = vmatprep.subr.mxu0 %v1244
    %1481 = vmatpush1.msra.mxu0 %v1243
    %1482 = vmatprep.subr.mxu0 %v1246
    %1483 = vmatpush1.msra.mxu0 %v1245
    %1484 = vmatprep.subr.mxu0 %v1248
    %1485 = vmatpush1.msra.mxu0 %v1247
    %1486 = vmatprep.subr.mxu0 %v1250
    %1487 = vmatpush1.msra.mxu0 %v1249
    %1488 = vmatprep.subr.mxu0 %v1252
    %1489 = vmatpush1.msra.mxu0 %v1251
    %1490 = vmatprep.subr.mxu0 0.0
    %1491 = vmatpush1.msra.mxu0 0.0
    %1492 = vmatprep.subr.mxu0 0.0
    %1493 = vmatpush1.msra.mxu0 0.0
    %1494 = vmatprep.subr.mxu0 0.0
    %1495 = vmatpush1.msra.mxu0 0.0
    %1496 = vmatprep.subr.mxu0 0.0
    %1497 = vmatpush1.msra.mxu0 0.0
    %1498 = vmatprep.subr.mxu0 0.0
    %1499 = vmatpush1.msra.mxu0 0.0
    %1500 = vmatprep.subr.mxu0 0.0
    %1501 = vmatpush1.msra.mxu0 0.0
    %1502 = vmatprep.subr.mxu0 0.0
    %1503 = vmatpush1.msra.mxu0 0.0
    %1504 = vmatprep.subr.mxu0 0.0
    %1505 = vmatpush1.msra.mxu0 0.0
    %1506 = vmatprep.subr.mxu0 0.0
    %1507 = vmatpush1.msra.mxu0 0.0
    %1508 = vmatprep.subr.mxu0 0.0
    %1509 = vmatpush1.msra.mxu0 0.0
    %1510 = vmatprep.subr.mxu0 0.0
    %1511 = vmatpush1.msra.mxu0 0.0
    %1512 = vmatprep.subr.mxu0 0.0
    %1513 = vmatpush1.msra.mxu0 0.0
    %1514 = vmatprep.subr.mxu0 0.0
    %1515 = vmatpush1.msra.mxu0 0.0
    %1516 = vmatprep.subr.mxu0 0.0
    %1517 = vmatpush1.msra.mxu0 0.0
    %1518 = vmatprep.subr.mxu0 0.0
    %1519 = vmatpush1.msra.mxu0 0.0
    %1520 = vmatprep.subr.mxu0 0.0
    %1521 = vmatpush1.msra.mxu0 0.0
    %1522 = vmatprep.subr.mxu0 0.0
    %1523 = vmatpush1.msra.mxu0 0.0
    %1524 = vmatprep.subr.mxu0 0.0
    %1525 = vmatpush1.msra.mxu0 0.0
    %1526 = vmatprep.subr.mxu0 0.0
    %1527 = vmatpush1.msra.mxu0 0.0
    %1528 = vmatprep.subr.mxu0 0.0
    %1529 = vmatpush1.msra.mxu0 0.0
    %1530 = vmatprep.subr.mxu0 0.0
    %1531 = vmatpush1.msra.mxu0 0.0
    %1532 = vmatprep.subr.mxu0 0.0
    %1533 = vmatpush1.msra.mxu0 0.0
    %1534 = vmatprep.subr.mxu0 0.0
    %1535 = vmatpush1.msra.mxu0 0.0
    %1536 = vmatprep.subr.mxu0 0.0
    %1537 = vmatpush1.msra.mxu0 0.0
    %1538 = vmatprep.mubr.f32.mxu0 0.0
    %1539 = vmatmul.mubr.f32.gmra.mrb[0].mxu0 %v1472
    %v1540 = vpop.f32.mrb[0].mxu0
    %v1541 = vadd.f32 0.0, %v1540
    %v1542 = vpop.f32.mrb[0].mxu0
    %v1543 = vadd.f32 0.0, %v1542
    %1544 = vdwg.mxu0
    %v1547 = vrot.slane %v1541, 4
    %v1548 = vrot.slane %v1543, 4
    %v1551 = vadd.f32 %v1227, %v1547
    %v1552 = vadd.f32 %v1229, %v1548
    %v1553 = vxor.u32 %v1551, 2147483648
    %v1554 = vmul.f32 %v1553, 1.442695
    %v1555 = vpow.pop %v1554
    %v1556 = vadd.f32 %v1555, 1.0
    %v1557 = vrcp.pop %v1556
    %v1558 = vmul.f32 1.0, %v1557
    %v1559 = vtanh.pop %v1552
    %v1560 = vxor.u32 %v1552, 2147483648
    %v1561 = vmul.f32 %v1560, 1.442695
    %v1562 = vpow.pop %v1561
    %v1563 = vadd.f32 %v1562, 1.0
    %v1564 = vrcp.pop %v1563
    %v1565 = vmul.f32 1.0, %v1564
    %v1567 = vrot.slane %v1465, 6
    %v1569 = vmul.f32 %v1558, %v1567
    %v1570 = vmul.f32 %v1558, %v1559
    %1572 = vrot.lane.b32.xlu0 %v1570, 64
    %v1573 = vpop.permute.xlu0 %1572
    %v1575 = vadd.f32 %v1569, %v1573
    %v1576 = vtanh.pop %v1575
    %v1577 = vmul.f32 %v1565, %v1576
    %v1579 = vrot.slane %v1577, 4
    %1580 = vrot.lane.b32.xlu0 %v1579, 64
    %v1581 = vpop.permute.xlu0 %1580
    %v1582 = vsel %vm204, %v1581, 0
    %1584 = vmatprep.subr.mxu0 %v1238
    %1585 = vmatpush1.msra.mxu0 %v1237
    %1586 = vmatprep.subr.mxu0 %v1240
    %1587 = vmatpush1.msra.mxu0 %v1239
    %1588 = vmatprep.subr.mxu0 %v1242
    %1589 = vmatpush1.msra.mxu0 %v1241
    %1590 = vmatprep.subr.mxu0 %v1244
    %1591 = vmatpush1.msra.mxu0 %v1243
    %1592 = vmatprep.subr.mxu0 %v1246
    %1593 = vmatpush1.msra.mxu0 %v1245
    %1594 = vmatprep.subr.mxu0 %v1248
    %1595 = vmatpush1.msra.mxu0 %v1247
    %1596 = vmatprep.subr.mxu0 %v1250
    %1597 = vmatpush1.msra.mxu0 %v1249
    %1598 = vmatprep.subr.mxu0 %v1252
    %1599 = vmatpush1.msra.mxu0 %v1251
    %1600 = vmatprep.subr.mxu0 0.0
    %1601 = vmatpush1.msra.mxu0 0.0
    %1602 = vmatprep.subr.mxu0 0.0
    %1603 = vmatpush1.msra.mxu0 0.0
    %1604 = vmatprep.subr.mxu0 0.0
    %1605 = vmatpush1.msra.mxu0 0.0
    %1606 = vmatprep.subr.mxu0 0.0
    %1607 = vmatpush1.msra.mxu0 0.0
    %1608 = vmatprep.subr.mxu0 0.0
    %1609 = vmatpush1.msra.mxu0 0.0
    %1610 = vmatprep.subr.mxu0 0.0
    %1611 = vmatpush1.msra.mxu0 0.0
    %1612 = vmatprep.subr.mxu0 0.0
    %1613 = vmatpush1.msra.mxu0 0.0
    %1614 = vmatprep.subr.mxu0 0.0
    %1615 = vmatpush1.msra.mxu0 0.0
    %1616 = vmatprep.subr.mxu0 0.0
    %1617 = vmatpush1.msra.mxu0 0.0
    %1618 = vmatprep.subr.mxu0 0.0
    %1619 = vmatpush1.msra.mxu0 0.0
    %1620 = vmatprep.subr.mxu0 0.0
    %1621 = vmatpush1.msra.mxu0 0.0
    %1622 = vmatprep.subr.mxu0 0.0
    %1623 = vmatpush1.msra.mxu0 0.0
    %1624 = vmatprep.subr.mxu0 0.0
    %1625 = vmatpush1.msra.mxu0 0.0
    %1626 = vmatprep.subr.mxu0 0.0
    %1627 = vmatpush1.msra.mxu0 0.0
    %1628 = vmatprep.subr.mxu0 0.0
    %1629 = vmatpush1.msra.mxu0 0.0
    %1630 = vmatprep.subr.mxu0 0.0
    %1631 = vmatpush1.msra.mxu0 0.0
    %1632 = vmatprep.subr.mxu0 0.0
    %1633 = vmatpush1.msra.mxu0 0.0
    %1634 = vmatprep.subr.mxu0 0.0
    %1635 = vmatpush1.msra.mxu0 0.0
    %1636 = vmatprep.subr.mxu0 0.0
    %1637 = vmatpush1.msra.mxu0 0.0
    %1638 = vmatprep.subr.mxu0 0.0
    %1639 = vmatpush1.msra.mxu0 0.0
    %1640 = vmatprep.subr.mxu0 0.0
    %1641 = vmatpush1.msra.mxu0 0.0
    %1642 = vmatprep.subr.mxu0 0.0
    %1643 = vmatpush1.msra.mxu0 0.0
    %1644 = vmatprep.subr.mxu0 0.0
    %1645 = vmatpush1.msra.mxu0 0.0
    %1646 = vmatprep.subr.mxu0 0.0
    %1647 = vmatpush1.msra.mxu0 0.0
    %1648 = vmatprep.mubr.f32.mxu0 0.0
    %1649 = vmatmul.mubr.f32.gmra.mrb[0].mxu0 %v1582
    %v1650 = vpop.f32.mrb[0].mxu0
    %v1651 = vadd.f32 0.0, %v1650
    %v1652 = vpop.f32.mrb[0].mxu0
    %v1653 = vadd.f32 0.0, %v1652
    %1654 = vdwg.mxu0
    %v1657 = vrot.slane %v1651, 2
    %v1658 = vrot.slane %v1653, 2
    %v1661 = vadd.f32 %v1227, %v1657
    %v1662 = vadd.f32 %v1229, %v1658
    %v1663 = vxor.u32 %v1661, 2147483648
    %v1664 = vmul.f32 %v1663, 1.442695
    %v1665 = vpow.pop %v1664
    %v1666 = vadd.f32 %v1665, 1.0
    %v1667 = vrcp.pop %v1666
    %v1668 = vmul.f32 1.0, %v1667
    %v1669 = vtanh.pop %v1662
    %v1670 = vxor.u32 %v1662, 2147483648
    %v1671 = vmul.f32 %v1670, 1.442695
    %v1672 = vpow.pop %v1671
    %v1673 = vadd.f32 %v1672, 1.0
    %v1674 = vrcp.pop %v1673
    %v1675 = vmul.f32 1.0, %v1674
    %v1677 = vrot.slane %v1575, 6
    %v1679 = vmul.f32 %v1668, %v1677
    %v1680 = vmul.f32 %v1668, %v1669
    %1682 = vrot.lane.b32.xlu0 %v1680, 64
    %v1683 = vpop.permute.xlu0 %1682
    %v1685 = vadd.f32 %v1679, %v1683
    %v1686 = vtanh.pop %v1685
    %v1687 = vmul.f32 %v1675, %v1686
    %v1689 = vrot.slane %v1687, 6
    %1690 = vrot.lane.b32.xlu0 %v1689, 64
    %v1691 = vpop.permute.xlu0 %1690
    %v1692 = vsel %vm204, %v1691, 0
    %1694 = vmatprep.subr.mxu0 %v1238
    %1695 = vmatpush1.msra.mxu0 %v1237
    %1696 = vmatprep.subr.mxu0 %v1240
    %1697 = vmatpush1.msra.mxu0 %v1239
    %1698 = vmatprep.subr.mxu0 %v1242
    %1699 = vmatpush1.msra.mxu0 %v1241
    %1700 = vmatprep.subr.mxu0 %v1244
    %1701 = vmatpush1.msra.mxu0 %v1243
    %1702 = vmatprep.subr.mxu0 %v1246
    %1703 = vmatpush1.msra.mxu0 %v1245
    %1704 = vmatprep.subr.mxu0 %v1248
    %1705 = vmatpush1.msra.mxu0 %v1247
    %1706 = vmatprep.subr.mxu0 %v1250
    %1707 = vmatpush1.msra.mxu0 %v1249
    %1708 = vmatprep.subr.mxu0 %v1252
    %1709 = vmatpush1.msra.mxu0 %v1251
    %1710 = vmatprep.subr.mxu0 0.0
    %1711 = vmatpush1.msra.mxu0 0.0
    %1712 = vmatprep.subr.mxu0 0.0
    %1713 = vmatpush1.msra.mxu0 0.0
    %1714 = vmatprep.subr.mxu0 0.0
    %1715 = vmatpush1.msra.mxu0 0.0
    %1716 = vmatprep.subr.mxu0 0.0
    %1717 = vmatpush1.msra.mxu0 0.0
    %1718 = vmatprep.subr.mxu0 0.0
    %1719 = vmatpush1.msra.mxu0 0.0
    %1720 = vmatprep.subr.mxu0 0.0
    %1721 = vmatpush1.msra.mxu0 0.0
    %1722 = vmatprep.subr.mxu0 0.0
    %1723 = vmatpush1.msra.mxu0 0.0
    %1724 = vmatprep.subr.mxu0 0.0
    %1725 = vmatpush1.msra.mxu0 0.0
    %1726 = vmatprep.subr.mxu0 0.0
    %1727 = vmatpush1.msra.mxu0 0.0
    %1728 = vmatprep.subr.mxu0 0.0
    %1729 = vmatpush1.msra.mxu0 0.0
    %1730 = vmatprep.subr.mxu0 0.0
    %1731 = vmatpush1.msra.mxu0 0.0
    %1732 = vmatprep.subr.mxu0 0.0
    %1733 = vmatpush1.msra.mxu0 0.0
    %1734 = vmatprep.subr.mxu0 0.0
    %1735 = vmatpush1.msra.mxu0 0.0
    %1736 = vmatprep.subr.mxu0 0.0
    %1737 = vmatpush1.msra.mxu0 0.0
    %1738 = vmatprep.subr.mxu0 0.0
    %1739 = vmatpush1.msra.mxu0 0.0
    %1740 = vmatprep.subr.mxu0 0.0
    %1741 = vmatpush1.msra.mxu0 0.0
    %1742 = vmatprep.subr.mxu0 0.0
    %1743 = vmatpush1.msra.mxu0 0.0
    %1744 = vmatprep.subr.mxu0 0.0
    %1745 = vmatpush1.msra.mxu0 0.0
    %1746 = vmatprep.subr.mxu0 0.0
    %1747 = vmatpush1.msra.mxu0 0.0
    %1748 = vmatprep.subr.mxu0 0.0
    %1749 = vmatpush1.msra.mxu0 0.0
    %1750 = vmatprep.subr.mxu0 0.0
    %1751 = vmatpush1.msra.mxu0 0.0
    %1752 = vmatprep.subr.mxu0 0.0
    %1753 = vmatpush1.msra.mxu0 0.0
    %1754 = vmatprep.subr.mxu0 0.0
    %1755 = vmatpush1.msra.mxu0 0.0
    %1756 = vmatprep.subr.mxu0 0.0
    %1757 = vmatpush1.msra.mxu0 0.0
    %1758 = vmatprep.mubr.f32.mxu0 0.0
    %1759 = vmatmul.mubr.f32.gmra.mrb[0].mxu0 %v1692
    %v1760 = vpop.f32.mrb[0].mxu0
    %v1761 = vadd.f32 0.0, %v1760
    %v1762 = vpop.f32.mrb[0].mxu0
    %v1763 = vadd.f32 0.0, %v1762
    %1764 = vdwg.mxu0
    %v1765 = vadd.f32 %v1233, %v1761
    %v1766 = vadd.f32 %v1235, %v1763
    %v1767 = vxor.u32 %v1765, 2147483648
    %v1768 = vmul.f32 %v1767, 1.442695
    %v1769 = vpow.pop %v1768
    %v1770 = vadd.f32 %v1769, 1.0
    %v1771 = vrcp.pop %v1770
    %v1772 = vmul.f32 1.0, %v1771
    %v1773 = vtanh.pop %v1766
    %v1774 = vxor.u32 %v1766, 2147483648
    %v1775 = vmul.f32 %v1774, 1.442695
    %v1776 = vpow.pop %v1775
    %v1777 = vadd.f32 %v1776, 1.0
    %v1778 = vrcp.pop %v1777
    %v1779 = vmul.f32 1.0, %v1778
    %v1781 = vrot.slane %v1685, 6
    %v1783 = vmul.f32 %v1772, %v1781
    %v1784 = vmul.f32 %v1772, %v1773
    %1786 = vrot.lane.b32.xlu0 %v1784, 64
    %v1787 = vpop.permute.xlu0 %1786
    %v1789 = vadd.f32 %v1783, %v1787
    %v1790 = vtanh.pop %v1789
    %v1791 = vmul.f32 %v1779, %v1790
    %1793 = vrot.lane.b32.xlu0 %v1791, 64
    %v1794 = vpop.permute.xlu0 %1793
    %v1795 = vsel %vm204, %v1794, 0
    %1797 = vmatprep.subr.mxu0 %v1238
    %1798 = vmatpush1.msra.mxu0 %v1237
    %1799 = vmatprep.subr.mxu0 %v1240
    %1800 = vmatpush1.msra.mxu0 %v1239
    %1801 = vmatprep.subr.mxu0 %v1242
    %1802 = vmatpush1.msra.mxu0 %v1241
    %1803 = vmatprep.subr.mxu0 %v1244
    %1804 = vmatpush1.msra.mxu0 %v1243
    %1805 = vmatprep.subr.mxu0 %v1246
    %1806 = vmatpush1.msra.mxu0 %v1245
    %1807 = vmatprep.subr.mxu0 %v1248
    %1808 = vmatpush1.msra.mxu0 %v1247
    %1809 = vmatprep.subr.mxu0 %v1250
    %1810 = vmatpush1.msra.mxu0 %v1249
    %1811 = vmatprep.subr.mxu0 %v1252
    %1812 = vmatpush1.msra.mxu0 %v1251
    %1813 = vmatprep.subr.mxu0 0.0
    %1814 = vmatpush1.msra.mxu0 0.0
    %1815 = vmatprep.subr.mxu0 0.0
    %1816 = vmatpush1.msra.mxu0 0.0
    %1817 = vmatprep.subr.mxu0 0.0
    %1818 = vmatpush1.msra.mxu0 0.0
    %1819 = vmatprep.subr.mxu0 0.0
    %1820 = vmatpush1.msra.mxu0 0.0
    %1821 = vmatprep.subr.mxu0 0.0
    %1822 = vmatpush1.msra.mxu0 0.0
    %1823 = vmatprep.subr.mxu0 0.0
    %1824 = vmatpush1.msra.mxu0 0.0
    %1825 = vmatprep.subr.mxu0 0.0
    %1826 = vmatpush1.msra.mxu0 0.0
    %1827 = vmatprep.subr.mxu0 0.0
    %1828 = vmatpush1.msra.mxu0 0.0
    %1829 = vmatprep.subr.mxu0 0.0
    %1830 = vmatpush1.msra.mxu0 0.0
    %1831 = vmatprep.subr.mxu0 0.0
    %1832 = vmatpush1.msra.mxu0 0.0
    %1833 = vmatprep.subr.mxu0 0.0
    %1834 = vmatpush1.msra.mxu0 0.0
    %1835 = vmatprep.subr.mxu0 0.0
    %1836 = vmatpush1.msra.mxu0 0.0
    %1837 = vmatprep.subr.mxu0 0.0
    %1838 = vmatpush1.msra.mxu0 0.0
    %1839 = vmatprep.subr.mxu0 0.0
    %1840 = vmatpush1.msra.mxu0 0.0
    %1841 = vmatprep.subr.mxu0 0.0
    %1842 = vmatpush1.msra.mxu0 0.0
    %1843 = vmatprep.subr.mxu0 0.0
    %1844 = vmatpush1.msra.mxu0 0.0
    %1845 = vmatprep.subr.mxu0 0.0
    %1846 = vmatpush1.msra.mxu0 0.0
    %1847 = vmatprep.subr.mxu0 0.0
    %1848 = vmatpush1.msra.mxu0 0.0
    %1849 = vmatprep.subr.mxu0 0.0
    %1850 = vmatpush1.msra.mxu0 0.0
    %1851 = vmatprep.subr.mxu0 0.0
    %1852 = vmatpush1.msra.mxu0 0.0
    %1853 = vmatprep.subr.mxu0 0.0
    %1854 = vmatpush1.msra.mxu0 0.0
    %1855 = vmatprep.subr.mxu0 0.0
    %1856 = vmatpush1.msra.mxu0 0.0
    %1857 = vmatprep.subr.mxu0 0.0
    %1858 = vmatpush1.msra.mxu0 0.0
    %1859 = vmatprep.subr.mxu0 0.0
    %1860 = vmatpush1.msra.mxu0 0.0
    %1861 = vmatprep.mubr.f32.mxu0 0.0
    %1862 = vmatmul.mubr.f32.gmra.mrb[0].mxu0 %v1795
    %v1863 = vpop.f32.mrb[0].mxu0
    %v1864 = vadd.f32 0.0, %v1863
    %v1865 = vpop.f32.mrb[0].mxu0
    %v1866 = vadd.f32 0.0, %v1865
    %1867 = vdwg.mxu0
    %v1870 = vrot.slane %v1864, 6
    %v1871 = vrot.slane %v1866, 6
    %v1874 = vadd.f32 %v1233, %v1870
    %v1875 = vadd.f32 %v1235, %v1871
    %v1876 = vxor.u32 %v1874, 2147483648
    %v1877 = vmul.f32 %v1876, 1.442695
    %v1878 = vpow.pop %v1877
    %v1879 = vadd.f32 %v1878, 1.0
    %v1880 = vrcp.pop %v1879
    %v1881 = vmul.f32 1.0, %v1880
    %v1882 = vtanh.pop %v1875
    %v1883 = vxor.u32 %v1875, 2147483648
    %v1884 = vmul.f32 %v1883, 1.442695
    %v1885 = vpow.pop %v1884
    %v1886 = vadd.f32 %v1885, 1.0
    %v1887 = vrcp.pop %v1886
    %v1888 = vmul.f32 1.0, %v1887
    %v1890 = vrot.slane %v1789, 6
    %v1892 = vmul.f32 %v1881, %v1890
    %v1893 = vmul.f32 %v1881, %v1882
    %1895 = vrot.lane.b32.xlu0 %v1893, 64
    %v1896 = vpop.permute.xlu0 %1895
    %v1898 = vadd.f32 %v1892, %v1896
    %v1899 = vtanh.pop %v1898
    %v1900 = vmul.f32 %v1888, %v1899
    %v1902 = vrot.slane %v1900, 2
    %1903 = vrot.lane.b32.xlu0 %v1902, 64
    %v1904 = vpop.permute.xlu0 %1903
    %v1905 = vsel %vm204, %v1904, 0
    %1907 = vmatprep.subr.mxu0 %v1238
    %1908 = vmatpush1.msra.mxu0 %v1237
    %1909 = vmatprep.subr.mxu0 %v1240
    %1910 = vmatpush1.msra.mxu0 %v1239
    %1911 = vmatprep.subr.mxu0 %v1242
    %1912 = vmatpush1.msra.mxu0 %v1241
    %1913 = vmatprep.subr.mxu0 %v1244
    %1914 = vmatpush1.msra.mxu0 %v1243
    %1915 = vmatprep.subr.mxu0 %v1246
    %1916 = vmatpush1.msra.mxu0 %v1245
    %1917 = vmatprep.subr.mxu0 %v1248
    %1918 = vmatpush1.msra.mxu0 %v1247
    %1919 = vmatprep.subr.mxu0 %v1250
    %1920 = vmatpush1.msra.mxu0 %v1249
    %1921 = vmatprep.subr.mxu0 %v1252
    %1922 = vmatpush1.msra.mxu0 %v1251
    %1923 = vmatprep.subr.mxu0 0.0
    %1924 = vmatpush1.msra.mxu0 0.0
    %1925 = vmatprep.subr.mxu0 0.0
    %1926 = vmatpush1.msra.mxu0 0.0
    %1927 = vmatprep.subr.mxu0 0.0
    %1928 = vmatpush1.msra.mxu0 0.0
    %1929 = vmatprep.subr.mxu0 0.0
    %1930 = vmatpush1.msra.mxu0 0.0
    %1931 = vmatprep.subr.mxu0 0.0
    %1932 = vmatpush1.msra.mxu0 0.0
    %1933 = vmatprep.subr.mxu0 0.0
    %1934 = vmatpush1.msra.mxu0 0.0
    %1935 = vmatprep.subr.mxu0 0.0
    %1936 = vmatpush1.msra.mxu0 0.0
    %1937 = vmatprep.subr.mxu0 0.0
    %1938 = vmatpush1.msra.mxu0 0.0
    %1939 = vmatprep.subr.mxu0 0.0
    %1940 = vmatpush1.msra.mxu0 0.0
    %1941 = vmatprep.subr.mxu0 0.0
    %1942 = vmatpush1.msra.mxu0 0.0
    %1943 = vmatprep.subr.mxu0 0.0
    %1944 = vmatpush1.msra.mxu0 0.0
    %1945 = vmatprep.subr.mxu0 0.0
    %1946 = vmatpush1.msra.mxu0 0.0
    %1947 = vmatprep.subr.mxu0 0.0
    %1948 = vmatpush1.msra.mxu0 0.0
    %1949 = vmatprep.subr.mxu0 0.0
    %1950 = vmatpush1.msra.mxu0 0.0
    %1951 = vmatprep.subr.mxu0 0.0
    %1952 = vmatpush1.msra.mxu0 0.0
    %1953 = vmatprep.subr.mxu0 0.0
    %1954 = vmatpush1.msra.mxu0 0.0
    %1955 = vmatprep.subr.mxu0 0.0
    %1956 = vmatpush1.msra.mxu0 0.0
    %1957 = vmatprep.subr.mxu0 0.0
    %1958 = vmatpush1.msra.mxu0 0.0
    %1959 = vmatprep.subr.mxu0 0.0
    %1960 = vmatpush1.msra.mxu0 0.0
    %1961 = vmatprep.subr.mxu0 0.0
    %1962 = vmatpush1.msra.mxu0 0.0
    %1963 = vmatprep.subr.mxu0 0.0
    %1964 = vmatpush1.msra.mxu0 0.0
    %1965 = vmatprep.subr.mxu0 0.0
    %1966 = vmatpush1.msra.mxu0 0.0
    %1967 = vmatprep.subr.mxu0 0.0
    %1968 = vmatpush1.msra.mxu0 0.0
    %1969 = vmatprep.subr.mxu0 0.0
    %1970 = vmatpush1.msra.mxu0 0.0
    %1971 = vmatprep.mubr.f32.mxu0 0.0
    %1972 = vmatmul.mubr.f32.gmra.mrb[0].mxu0 %v1905
    %v1973 = vpop.f32.mrb[0].mxu0
    %v1974 = vadd.f32 0.0, %v1973
    %v1975 = vpop.f32.mrb[0].mxu0
    %v1976 = vadd.f32 0.0, %v1975
    %1977 = vdwg.mxu0
    %v1980 = vrot.slane %v1974, 4
    %v1981 = vrot.slane %v1976, 4
    %v1984 = vadd.f32 %v1233, %v1980
    %v1985 = vadd.f32 %v1235, %v1981
    %v1986 = vxor.u32 %v1984, 2147483648
    %v1987 = vmul.f32 %v1986, 1.442695
    %v1988 = vpow.pop %v1987
    %v1989 = vadd.f32 %v1988, 1.0
    %v1990 = vrcp.pop %v1989
    %v1991 = vmul.f32 1.0, %v1990
    %v1992 = vtanh.pop %v1985
    %v1993 = vxor.u32 %v1985, 2147483648
    %v1994 = vmul.f32 %v1993, 1.442695
    %v1995 = vpow.pop %v1994
    %v1996 = vadd.f32 %v1995, 1.0
    %v1997 = vrcp.pop %v1996
    %v1998 = vmul.f32 1.0, %v1997
    %v2000 = vrot.slane %v1898, 6
    %v2002 = vmul.f32 %v1991, %v2000
    %v2003 = vmul.f32 %v1991, %v1992
    %2005 = vrot.lane.b32.xlu0 %v2003, 64
    %v2006 = vpop.permute.xlu0 %2005
    %v2008 = vadd.f32 %v2002, %v2006
    %v2009 = vtanh.pop %v2008
    %v2010 = vmul.f32 %v1998, %v2009
    %v2012 = vrot.slane %v2010, 4
    %2013 = vrot.lane.b32.xlu0 %v2012, 64
    %v2014 = vpop.permute.xlu0 %2013
    %v2015 = vsel %vm204, %v2014, 0
    %2017 = vmatprep.subr.mxu0 %v1238
    %2018 = vmatpush1.msra.mxu0 %v1237
    %2019 = vmatprep.subr.mxu0 %v1240
    %2020 = vmatpush1.msra.mxu0 %v1239
    %2021 = vmatprep.subr.mxu0 %v1242
    %2022 = vmatpush1.msra.mxu0 %v1241
    %2023 = vmatprep.subr.mxu0 %v1244
    %2024 = vmatpush1.msra.mxu0 %v1243
    %2025 = vmatprep.subr.mxu0 %v1246
    %2026 = vmatpush1.msra.mxu0 %v1245
    %2027 = vmatprep.subr.mxu0 %v1248
    %2028 = vmatpush1.msra.mxu0 %v1247
    %2029 = vmatprep.subr.mxu0 %v1250
    %2030 = vmatpush1.msra.mxu0 %v1249
    %2031 = vmatprep.subr.mxu0 %v1252
    %2032 = vmatpush1.msra.mxu0 %v1251
    %2033 = vmatprep.subr.mxu0 0.0
    %2034 = vmatpush1.msra.mxu0 0.0
    %2035 = vmatprep.subr.mxu0 0.0
    %2036 = vmatpush1.msra.mxu0 0.0
    %2037 = vmatprep.subr.mxu0 0.0
    %2038 = vmatpush1.msra.mxu0 0.0
    %2039 = vmatprep.subr.mxu0 0.0
    %2040 = vmatpush1.msra.mxu0 0.0
    %2041 = vmatprep.subr.mxu0 0.0
    %2042 = vmatpush1.msra.mxu0 0.0
    %2043 = vmatprep.subr.mxu0 0.0
    %2044 = vmatpush1.msra.mxu0 0.0
    %2045 = vmatprep.subr.mxu0 0.0
    %2046 = vmatpush1.msra.mxu0 0.0
    %2047 = vmatprep.subr.mxu0 0.0
    %2048 = vmatpush1.msra.mxu0 0.0
    %2049 = vmatprep.subr.mxu0 0.0
    %2050 = vmatpush1.msra.mxu0 0.0
    %2051 = vmatprep.subr.mxu0 0.0
    %2052 = vmatpush1.msra.mxu0 0.0
    %2053 = vmatprep.subr.mxu0 0.0
    %2054 = vmatpush1.msra.mxu0 0.0
    %2055 = vmatprep.subr.mxu0 0.0
    %2056 = vmatpush1.msra.mxu0 0.0
    %2057 = vmatprep.subr.mxu0 0.0
    %2058 = vmatpush1.msra.mxu0 0.0
    %2059 = vmatprep.subr.mxu0 0.0
    %2060 = vmatpush1.msra.mxu0 0.0
    %2061 = vmatprep.subr.mxu0 0.0
    %2062 = vmatpush1.msra.mxu0 0.0
    %2063 = vmatprep.subr.mxu0 0.0
    %2064 = vmatpush1.msra.mxu0 0.0
    %2065 = vmatprep.subr.mxu0 0.0
    %2066 = vmatpush1.msra.mxu0 0.0
    %2067 = vmatprep.subr.mxu0 0.0
    %2068 = vmatpush1.msra.mxu0 0.0
    %2069 = vmatprep.subr.mxu0 0.0
    %2070 = vmatpush1.msra.mxu0 0.0
    %2071 = vmatprep.subr.mxu0 0.0
    %2072 = vmatpush1.msra.mxu0 0.0
    %2073 = vmatprep.subr.mxu0 0.0
    %2074 = vmatpush1.msra.mxu0 0.0
    %2075 = vmatprep.subr.mxu0 0.0
    %2076 = vmatpush1.msra.mxu0 0.0
    %2077 = vmatprep.subr.mxu0 0.0
    %2078 = vmatpush1.msra.mxu0 0.0
    %2079 = vmatprep.subr.mxu0 0.0
    %2080 = vmatpush1.msra.mxu0 0.0
    %2081 = vmatprep.mubr.f32.mxu0 0.0
    %2082 = vmatmul.mubr.f32.gmra.mrb[0].mxu0 %v2015
    %v2083 = vpop.f32.mrb[0].mxu0
    %v2084 = vadd.f32 0.0, %v2083
    %v2085 = vpop.f32.mrb[0].mxu0
    %v2086 = vadd.f32 0.0, %v2085
    %2087 = vdwg.mxu0
    %v2090 = vrot.slane %v2084, 2
    %v2091 = vrot.slane %v2086, 2
    %v2094 = vadd.f32 %v1233, %v2090
    %v2095 = vadd.f32 %v1235, %v2091
    %v2096 = vxor.u32 %v2094, 2147483648
    %v2097 = vmul.f32 %v2096, 1.442695
    %v2098 = vpow.pop %v2097
    %v2099 = vadd.f32 %v2098, 1.0
    %v2100 = vrcp.pop %v2099
    %v2101 = vmul.f32 1.0, %v2100
    %v2102 = vtanh.pop %v2095
    %v2103 = vxor.u32 %v2095, 2147483648
    %v2104 = vmul.f32 %v2103, 1.442695
    %v2105 = vpow.pop %v2104
    %v2106 = vadd.f32 %v2105, 1.0
    %v2107 = vrcp.pop %v2106
    %v2108 = vmul.f32 1.0, %v2107
    %v2110 = vrot.slane %v2008, 6
    %v2112 = vmul.f32 %v2101, %v2110
    %v2113 = vmul.f32 %v2101, %v2102
    %2115 = vrot.lane.b32.xlu0 %v2113, 64
    %v2116 = vpop.permute.xlu0 %2115
    %v2118 = vadd.f32 %v2112, %v2116
    %v2119 = vtanh.pop %v2118
    %v2120 = vmul.f32 %v2108, %v2119
    %v2121 = vrot.slane %v1358, 2
    %2122 = vrot.lane.b32.xlu0 %v2121, 96
    %v2123 = vpop.permute.xlu0 %2122
    %v2125 = vadd.f32 %v2120, %v2123
    %v2126 = vmul.f32 %v2125, 0.5
    %v2127 = vld [vmem:[%s9] sm:$0xff]
    %v2128 = vld [vmem:[%s9 + $0x8] sm:$0xff]
    %v2129 = vld [vmem:[%s9 + $0x10] sm:$0xff]
    %v2130 = vld [vmem:[%s9 + $0x18] sm:$0xff]
    %v2131 = vld [vmem:[%s10] sm:$0x1]
    %v2133 = vlaneseq
    %v2134 = vshrl.u32 %v2133, 7
    %v2135 = vsub.s32 0, %v2134
    %v2136 = vrot.slane %v2131, %v2135
    %v2139 = vrot.slane %v2126, 6
    %2140 = vrot.lane.b32.xlu0 %v2139, 64
    %v2141 = vpop.permute.xlu0 %2140
    %v2142 = vsel %vm102, %v2141, 0
    %2144 = vmatprep.subr.mxu0 0.0
    %2145 = vmatpush1.msra.mxu0 %v2127
    %2146 = vmatprep.subr.mxu0 0.0
    %2147 = vmatpush1.msra.mxu0 %v2128
    %2148 = vmatprep.subr.mxu0 0.0
    %2149 = vmatpush1.msra.mxu0 %v2129
    %2150 = vmatprep.subr.mxu0 0.0
    %2151 = vmatpush1.msra.mxu0 %v2130
    %2152 = vmatprep.subr.mxu0 0.0
    %2153 = vmatpush1.msra.mxu0 0.0
    %2154 = vmatprep.subr.mxu0 0.0
    %2155 = vmatpush1.msra.mxu0 0.0
    %2156 = vmatprep.subr.mxu0 0.0
    %2157 = vmatpush1.msra.mxu0 0.0
    %2158 = vmatprep.subr.mxu0 0.0
    %2159 = vmatpush1.msra.mxu0 0.0
    %2160 = vmatprep.subr.mxu0 0.0
    %2161 = vmatpush1.msra.mxu0 0.0
    %2162 = vmatprep.subr.mxu0 0.0
    %2163 = vmatpush1.msra.mxu0 0.0
    %2164 = vmatprep.subr.mxu0 0.0
    %2165 = vmatpush1.msra.mxu0 0.0
    %2166 = vmatprep.subr.mxu0 0.0
    %2167 = vmatpush1.msra.mxu0 0.0
    %2168 = vmatprep.subr.mxu0 0.0
    %2169 = vmatpush1.msra.mxu0 0.0
    %2170 = vmatprep.subr.mxu0 0.0
    %2171 = vmatpush1.msra.mxu0 0.0
    %2172 = vmatprep.subr.mxu0 0.0
    %2173 = vmatpush1.msra.mxu0 0.0
    %2174 = vmatprep.subr.mxu0 0.0
    %2175 = vmatpush1.msra.mxu0 0.0
    %2176 = vmatprep.subr.mxu0 0.0
    %2177 = vmatpush1.msra.mxu0 0.0
    %2178 = vmatprep.subr.mxu0 0.0
    %2179 = vmatpush1.msra.mxu0 0.0
    %2180 = vmatprep.subr.mxu0 0.0
    %2181 = vmatpush1.msra.mxu0 0.0
    %2182 = vmatprep.subr.mxu0 0.0
    %2183 = vmatpush1.msra.mxu0 0.0
    %2184 = vmatprep.subr.mxu0 0.0
    %2185 = vmatpush1.msra.mxu0 0.0
    %2186 = vmatprep.subr.mxu0 0.0
    %2187 = vmatpush1.msra.mxu0 0.0
    %2188 = vmatprep.subr.mxu0 0.0
    %2189 = vmatpush1.msra.mxu0 0.0
    %2190 = vmatprep.subr.mxu0 0.0
    %2191 = vmatpush1.msra.mxu0 0.0
    %2192 = vmatprep.subr.mxu0 0.0
    %2193 = vmatpush1.msra.mxu0 0.0
    %2194 = vmatprep.subr.mxu0 0.0
    %2195 = vmatpush1.msra.mxu0 0.0
    %2196 = vmatprep.subr.mxu0 0.0
    %2197 = vmatpush1.msra.mxu0 0.0
    %2198 = vmatprep.subr.mxu0 0.0
    %2199 = vmatpush1.msra.mxu0 0.0
    %2200 = vmatprep.subr.mxu0 0.0
    %2201 = vmatpush1.msra.mxu0 0.0
    %2202 = vmatprep.subr.mxu0 0.0
    %2203 = vmatpush1.msra.mxu0 0.0
    %2204 = vmatprep.subr.mxu0 0.0
    %2205 = vmatpush1.msra.mxu0 0.0
    %2206 = vmatprep.subr.mxu0 0.0
    %2207 = vmatpush1.msra.mxu0 0.0
    %2208 = vmatprep.mubr.f32.mxu0 0.0
    %2209 = vmatmul.mubr.f32.gmra.mrb[0].mxu0 %v2142
    %v2210 = vpop.f32.mrb[0].mxu0
    %v2211 = vadd.f32 %v2136, %v2210
    %v2212 = vpop.f32.mrb[0].mxu0
    %2213 = vdwg.mxu0
    %vm2214 = vcmask 25600
    %2215 = vst.msk [vmem:[#allocation9] sm:$0x3] %vm2214, %v2211
    // Predicated region
    $region58: #{bilstm_forward.1} parent=1 // pred_check
      _
    $region59: #{bilstm_forward.1} parent=1 // pred_check_branch
      %2217 = sbr.rel (0) target = $region61
    $region60: #{bilstm_forward.1} parent=1 // pred_region
      %s2219 = ssub.s32 32, 32
      %2220 = vsyncadd [#allocation5], %s2219
      %s2222 = sshll.u32 [#allocation9], 4
      %s2223 = int_to_ptr.vmem [resolvable:$true] %s2222
      %2225 = dma.vmem_to_hbm [thread:$0]  %s2223, 32, %s11, [#allocation5]
    $region61: #{bilstm_forward.1} parent=1 // pred_fallthru
      _
    // Predicated region
    $region62: #{bilstm_forward.1} parent=1 // pred_check
      _
    $region63: #{bilstm_forward.1} parent=1 // pred_check_branch
      %2227 = sbr.rel (0) target = $region65
    $region64: #{bilstm_forward.1} parent=1 // pred_region
      %2228 = dma.done [#allocation5], 32
    $region65: #{bilstm_forward.1} parent=1 // pred_fallthru
      _
    %2229 = vsyncpa [#allocation4], 1
    %2230 = vsyncpa [#allocation7], 1
    %2231 = vsyncpa [#allocation5], 1

</llo_original>
